<compile_context>
chip_gen: v6e
topology: v6e:2x2x1
jax: 0.10.0
libtpu: 0.0.40
codegen_flags: <defaults>
</compile_context>

<pallas_src>
import jax
import jax.numpy as jnp
from jax.experimental import pallas as pl
from jax.experimental.pallas import tpu as pltpu


def _round_up(n, m):
    return ((n + m - 1) // m) * m


# --------------------------------------------------------------------------
# Kernel: plain 3-layer MLP on (possibly row-folded) tiles.  All matmuls hit
# the MXU with f32 accumulation; bias/ReLU/sigmoid epilogue stays in f32.
# --------------------------------------------------------------------------
def _mlp_kernel(x_ref, w1_ref, b1_ref, w2_ref, b2_ref, w3_ref, b3_ref, o_ref):
    # In-kernel cast of the streamed activations (avoids a separate wrapper-side
    # convert op that would double input HBM traffic).
    x = x_ref[...].astype(w1_ref.dtype)

    # Layer 1: Linear + ReLU.
    h1 = jnp.dot(x, w1_ref[...], preferred_element_type=jnp.float32)
    h1 = jnp.maximum(h1 + b1_ref[...], 0.0)
    # Dropout(0.3): identity in eval mode.

    # Layer 2: Linear + ReLU.
    h2 = jnp.dot(h1.astype(w2_ref.dtype), w2_ref[...],
                 preferred_element_type=jnp.float32)
    h2 = jnp.maximum(h2 + b2_ref[...], 0.0)
    # Dropout(0.3): identity in eval mode.

    # Layer 3: Linear + Sigmoid (logistic on the EUP).
    logits = jnp.dot(h2.astype(w3_ref.dtype), w3_ref[...],
                     preferred_element_type=jnp.float32)
    o_ref[...] = jax.nn.sigmoid(logits + b3_ref[...]).astype(o_ref.dtype)


# --------------------------------------------------------------------------
# One-time parameter preparation (off the hot path).
# --------------------------------------------------------------------------
def choose_fold(batch, out_dim, max_fold=8):
    """Pick a row-fold factor f so the kernel's output width f*out_dim is a
    multiple of 128 (fully lane-dense) when possible."""
    if out_dim % 128 == 0:
        return 1                                    # already lane-dense
    for f in (8, 4, 2):
        if f <= max_fold and batch % f == 0 and (f * out_dim) % 128 == 0:
            return f                                # fully dense output rows
    for f in (8, 4, 2):
        if f <= max_fold and batch % f == 0:
            return f                                # partial densification
    return 1


def prepare_params(params, *, fold=1, compute_dtype=jnp.bfloat16):
    """Cast + fold weights ONCE:
         W_f = kron(I_fold, W)   (block-diagonal, shape (fold*in, fold*out))
         b_f = tile(b, fold)
    Then x.reshape(B/fold, fold*in) @ W_f equals (x @ W) packed row-major, so
    the (B, out) result is recovered by a free metadata reshape — lane-dense
    I/O with zero in-kernel relayout.  Biases stay f32 for the f32 epilogue."""
    w1, b1, w2, b2, w3, b3 = params
    eye = jnp.eye(fold, dtype=jnp.float32)

    def fold_w(w):
        return jnp.kron(eye, w.astype(jnp.float32)).astype(compute_dtype)

    def fold_b(b):
        return jnp.tile(b.astype(jnp.float32), (1, fold))

    return (fold_w(w1), fold_b(b1), fold_w(w2), fold_b(b2),
            fold_w(w3), fold_b(b3)), fold


# --------------------------------------------------------------------------
# Forward wrapper.
# --------------------------------------------------------------------------
def sensor_recommender_forward(x, prepared, *, tile_b=8192,
                               out_dtype=jnp.float32,
                               vmem_limit_bytes=64 * 1024 * 1024):
    """Fused MLP forward.

    x: (B, input_dim), any float dtype (cast in-kernel to the weight dtype).
    prepared: output of prepare_params().
    tile_b: batch-tile size in ORIGINAL rows (large tiles amortise the ~0.35 us
        per-grid-step overhead; sized against scoped VMEM — 16 MiB default on
        v5e, 32 MiB on v6e/v7x, 64 MiB physical per TC on v7x).
    out_dtype: jnp.float32 (default) or jnp.bfloat16 if the consumer tolerates
        ~3-digit precision on sigmoid outputs (cuts output HBM traffic 2x).
    """
    (w1, b1, w2, b2, w3, b3), fold = prepared
    B, in_dim = x.shape
    if B % fold != 0:
        raise ValueError(f"batch {B} not divisible by fold={fold}; "
                         "use prepare_params(..., fold=1) for this batch.")
    if w1.shape[0] != fold * in_dim:
        raise ValueError("prepared params do not match the input feature dim")
    out_dim = w3.shape[1] // fold

    rows = B // fold                         # folded-row count
    xf = x.reshape(rows, fold * in_dim)      # free metadata reshape (row-major)

    # Tile (in folded rows): as big as requested, multiple of 8, but never a
    # single grid step for non-tiny batches so v7x's 2 TensorCores both work.
    tile_rows = max(8, (tile_b // fold) // 8 * 8)
    if rows > 8:
        tile_rows = max(8, min(tile_rows, _round_up(-(-rows // 2), 8)))
    else:
        tile_rows = rows                     # single full-array block
    grid = (pl.cdiv(rows, tile_rows),)

    def _resident(arr):
        # Same block every grid step -> stays VMEM-resident across the grid.
        return pl.BlockSpec(arr.shape, lambda i: (0, 0))

    param_bytes = sum(int(a.size) * a.dtype.itemsize
                      for a in (w1, b1, w2, b2, w3, b3))
    cost = pl.CostEstimate(
        flops=2 * rows * (w1.shape[0] * w1.shape[1]
                          + w2.shape[0] * w2.shape[1]
                          + w3.shape[0] * w3.shape[1]),
        transcendentals=B * out_dim,                     # sigmoid
        bytes_accessed=int(x.size) * x.dtype.itemsize + param_bytes
                       + B * out_dim * jnp.dtype(out_dtype).itemsize,
    )

    out = pl.pallas_call(
        _mlp_kernel,
        out_shape=jax.ShapeDtypeStruct((rows, fold * out_dim), out_dtype),
        grid=grid,
        in_specs=[
            pl.BlockSpec((tile_rows, fold * in_dim), lambda i: (i, 0)),  # x streamed
            _resident(w1), _resident(b1),
            _resident(w2), _resident(b2),
            _resident(w3), _resident(b3),
        ],
        out_specs=pl.BlockSpec((tile_rows, fold * out_dim), lambda i: (i, 0)),
        compiler_params=pltpu.CompilerParams(
            dimension_semantics=("parallel",),
            vmem_limit_bytes=vmem_limit_bytes),
        cost_estimate=cost,
    )(xf, w1, b1, w2, b2, w3, b3)

    return out.reshape(B, out_dim)           # free metadata reshape back


# --------------------------------------------------------------------------
# Init / reference.
# --------------------------------------------------------------------------
def init_params(key, input_dim, output_dim):
    """PyTorch-style init; weights stored transposed as (in, out), biases (1, out)."""
    ks = jax.random.split(key, 6)
    dims = [(input_dim, 128), (128, 64), (64, output_dim)]
    params = []
    for i, (fan_in, fan_out) in enumerate(dims):
        bound = 1.0 / jnp.sqrt(fan_in)
        w = jax.random.uniform(ks[2 * i], (fan_in, fan_out), jnp.float32,
                               minval=-bound, maxval=bound)
        b = jax.random.uniform(ks[2 * i + 1], (1, fan_out), jnp.float32,
                               minval=-bound, maxval=bound)
        params.extend([w, b])
    return tuple(params)


def _reference_forward(x, params):
    """Plain-JAX high-precision reference."""
    w1, b1, w2, b2, w3, b3 = params
    dot = lambda a, b: jnp.dot(a, b, precision=jax.lax.Precision.HIGHEST)
    h = jnp.maximum(dot(x, w1) + b1, 0.0)
    h = jnp.maximum(dot(h, w2) + b2, 0.0)
    return jax.nn.sigmoid(dot(h, w3) + b3)


if __name__ == "__main__":
    key = jax.random.PRNGKey(0)
    k_x, k_p, k_x2 = jax.random.split(key, 3)

    batch, input_dim, output_dim = 128, 32, 16
    x = jax.random.normal(k_x, (batch, input_dim), jnp.float32)
    raw = init_params(k_p, input_dim, output_dim)
    ref = _reference_forward(x, raw)

    fold = choose_fold(batch, output_dim)          # -> 8 (lane-dense 8*16 = 128)

    # 1) f32 compute path, small tile so the grid has 2 steps (exercises
    #    batch tiling, resident weights, lane-dense folded output).
    prep_f32 = prepare_params(raw, fold=fold, compute_dtype=jnp.float32)
    out_f32 = jax.block_until_ready(
        sensor_recommender_forward(x, prep_f32, tile_b=64))
    assert out_f32.shape == (batch, output_dim)
    assert jnp.allclose(out_f32, ref, atol=2e-3), "f32 folded kernel mismatch"

    # 2) Default bf16 performance path (default tile_b; still >= 2 grid steps).
    prep_bf16 = prepare_params(raw, fold=fold, compute_dtype=jnp.bfloat16)
    out_bf16 = jax.block_until_ready(
        sensor_recommender_forward(x, prep_bf16))
    assert out_bf16.shape == (batch, output_dim)
    assert jnp.allclose(out_bf16, ref, atol=2.5e-2), "bf16 folded kernel mismatch"

    # 3) fold=1 fallback with a batch that is not a multiple of 8 (partial
    #    trailing tile, narrow masked-store output path).
    batch2 = 52
    x2 = jax.random.normal(k_x2, (batch2, input_dim), jnp.float32)
    ref2 = _reference_forward(x2, raw)
    prep_plain = prepare_params(raw, fold=1, compute_dtype=jnp.bfloat16)
    out2 = jax.block_until_ready(
        sensor_recommender_forward(x2, prep_plain, tile_b=32))
    assert out2.shape == (batch2, output_dim)
    assert jnp.allclose(out2, ref2, atol=2.5e-2), "fold=1 kernel mismatch"

    print("KERNEL_OK")
</pallas_src>

<mosaic_0001>
module attributes {stable_mosaic.version = 11 : i64} {
  func.func @_mlp_kernel(%arg0: i32, %arg1: memref<8x256xf32, #tpu.memory_space<vmem>>, %arg2: memref<256x1024xf32, #tpu.memory_space<vmem>>, %arg3: memref<1x1024xf32, #tpu.memory_space<vmem>>, %arg4: memref<1024x512xf32, #tpu.memory_space<vmem>>, %arg5: memref<1x512xf32, #tpu.memory_space<vmem>>, %arg6: memref<512x128xf32, #tpu.memory_space<vmem>>, %arg7: memref<1x128xf32, #tpu.memory_space<vmem>>, %arg8: memref<8x128xf32, #tpu.memory_space<vmem>>) attributes {dimension_semantics = [#tpu.dimension_semantics<parallel>], iteration_bounds = array<i64: 2>, scalar_prefetch = 0 : i64, scratch_operands = 0 : i64, tpu.core_type = #tpu.core_type<tc>, window_params = [{transform_indices = @transform_0, window_bounds = array<i64: 8, 256>}, {pipeline_mode = #tpu.pipeline_mode<synchronous>, transform_indices = @transform_1, window_bounds = array<i64: 256, 1024>}, {pipeline_mode = #tpu.pipeline_mode<synchronous>, transform_indices = @transform_2, window_bounds = array<i64: 1, 1024>}, {pipeline_mode = #tpu.pipeline_mode<synchronous>, transform_indices = @transform_3, window_bounds = array<i64: 1024, 512>}, {pipeline_mode = #tpu.pipeline_mode<synchronous>, transform_indices = @transform_4, window_bounds = array<i64: 1, 512>}, {pipeline_mode = #tpu.pipeline_mode<synchronous>, transform_indices = @transform_5, window_bounds = array<i64: 512, 128>}, {pipeline_mode = #tpu.pipeline_mode<synchronous>, transform_indices = @transform_6, window_bounds = array<i64: 1, 128>}, {transform_indices = @transform_7, window_bounds = array<i64: 8, 128>}]} {
    %c0 = arith.constant 0 : index
    %c0_0 = arith.constant 0 : index
    %0 = vector.load %arg1[%c0, %c0_0] : memref<8x256xf32, #tpu.memory_space<vmem>>, vector<8x256xf32>
    %c0_1 = arith.constant 0 : index
    %c0_2 = arith.constant 0 : index
    %1 = vector.load %arg2[%c0_1, %c0_2] : memref<256x1024xf32, #tpu.memory_space<vmem>>, vector<256x1024xf32>
    %cst = arith.constant dense<0.000000e+00> : vector<8x1024xf32>
    %2 = tpu.matmul %0, %1, %cst {dimension_numbers = #tpu.dot_dimension_numbers<[1], [0], [0], [1], [0, 0, 1, 1], [], []>} : vector<8x256xf32>, vector<256x1024xf32>, vector<8x1024xf32> -> vector<8x1024xf32>
    %c0_3 = arith.constant 0 : index
    %c0_4 = arith.constant 0 : index
    %3 = vector.load %arg3[%c0_3, %c0_4] : memref<1x1024xf32, #tpu.memory_space<vmem>>, vector<1x1024xf32>
    %4 = vector.broadcast %3 : vector<1x1024xf32> to vector<8x1024xf32>
    %5 = arith.addf %2, %4 : vector<8x1024xf32>
    %cst_5 = arith.constant 0.000000e+00 : f32
    %6 = vector.broadcast %cst_5 : f32 to vector<8x1024xf32>
    %7 = arith.maximumf %5, %6 : vector<8x1024xf32>
    %c0_6 = arith.constant 0 : index
    %c0_7 = arith.constant 0 : index
    %8 = vector.load %arg4[%c0_6, %c0_7] : memref<1024x512xf32, #tpu.memory_space<vmem>>, vector<1024x512xf32>
    %cst_8 = arith.constant dense<0.000000e+00> : vector<8x512xf32>
    %9 = tpu.matmul %7, %8, %cst_8 {dimension_numbers = #tpu.dot_dimension_numbers<[1], [0], [0], [1], [0, 0, 1, 1], [], []>} : vector<8x1024xf32>, vector<1024x512xf32>, vector<8x512xf32> -> vector<8x512xf32>
    %c0_9 = arith.constant 0 : index
    %c0_10 = arith.constant 0 : index
    %10 = vector.load %arg5[%c0_9, %c0_10] : memref<1x512xf32, #tpu.memory_space<vmem>>, vector<1x512xf32>
    %11 = vector.broadcast %10 : vector<1x512xf32> to vector<8x512xf32>
    %12 = arith.addf %9, %11 : vector<8x512xf32>
    %cst_11 = arith.constant 0.000000e+00 : f32
    %13 = vector.broadcast %cst_11 : f32 to vector<8x512xf32>
    %14 = arith.maximumf %12, %13 : vector<8x512xf32>
    %c0_12 = arith.constant 0 : index
    %c0_13 = arith.constant 0 : index
    %15 = vector.load %arg6[%c0_12, %c0_13] : memref<512x128xf32, #tpu.memory_space<vmem>>, vector<512x128xf32>
    %cst_14 = arith.constant dense<0.000000e+00> : vector<8x128xf32>
    %16 = tpu.matmul %14, %15, %cst_14 {dimension_numbers = #tpu.dot_dimension_numbers<[1], [0], [0], [1], [0, 0, 1, 1], [], []>} : vector<8x512xf32>, vector<512x128xf32>, vector<8x128xf32> -> vector<8x128xf32>
    %c0_15 = arith.constant 0 : index
    %c0_16 = arith.constant 0 : index
    %17 = vector.load %arg7[%c0_15, %c0_16] : memref<1x128xf32, #tpu.memory_space<vmem>>, vector<1x128xf32>
    %18 = vector.broadcast %17 : vector<1x128xf32> to vector<8x128xf32>
    %19 = arith.addf %16, %18 : vector<8x128xf32>
    %20 = arith.negf %19 : vector<8x128xf32>
    %21 = math.exp %20 : vector<8x128xf32>
    %cst_17 = arith.constant 1.000000e+00 : f32
    %22 = vector.broadcast %cst_17 : f32 to vector<8x128xf32>
    %23 = arith.addf %22, %21 : vector<8x128xf32>
    %24 = arith.divf %22, %23 : vector<8x128xf32>
    %c0_18 = arith.constant 0 : index
    %c0_19 = arith.constant 0 : index
    %25 = vector.load %arg8[%c0_18, %c0_19] : memref<8x128xf32, #tpu.memory_space<vmem>>, vector<8x128xf32>
    tpu.vector_store %arg8[%c0_18, %c0_19], %24 {strides = array<i32>} : memref<8x128xf32, #tpu.memory_space<vmem>>, vector<8x128xf32>,
    return
  }
  func.func @transform_0(%arg0: i32) -> (i32, i32) {
    %c0_i32 = arith.constant 0 : i32
    %c0_i32_0 = arith.constant 0 : i32
    return %arg0, %c0_i32 : i32, i32
  }
  func.func @transform_1(%arg0: i32) -> (i32, i32) {
    %c0_i32 = arith.constant 0 : i32
    %c0_i32_0 = arith.constant 0 : i32
    %c0_i32_1 = arith.constant 0 : i32
    return %c0_i32, %c0_i32_0 : i32, i32
  }
  func.func @transform_2(%arg0: i32) -> (i32, i32) {
    %c0_i32 = arith.constant 0 : i32
    %c0_i32_0 = arith.constant 0 : i32
    %c0_i32_1 = arith.constant 0 : i32
    return %c0_i32, %c0_i32_0 : i32, i32
  }
  func.func @transform_3(%arg0: i32) -> (i32, i32) {
    %c0_i32 = arith.constant 0 : i32
    %c0_i32_0 = arith.constant 0 : i32
    %c0_i32_1 = arith.constant 0 : i32
    return %c0_i32, %c0_i32_0 : i32, i32
  }
  func.func @transform_4(%arg0: i32) -> (i32, i32) {
    %c0_i32 = arith.constant 0 : i32
    %c0_i32_0 = arith.constant 0 : i32
    %c0_i32_1 = arith.constant 0 : i32
    return %c0_i32, %c0_i32_0 : i32, i32
  }
  func.func @transform_5(%arg0: i32) -> (i32, i32) {
    %c0_i32 = arith.constant 0 : i32
    %c0_i32_0 = arith.constant 0 : i32
    %c0_i32_1 = arith.constant 0 : i32
    return %c0_i32, %c0_i32_0 : i32, i32
  }
  func.func @transform_6(%arg0: i32) -> (i32, i32) {
    %c0_i32 = arith.constant 0 : i32
    %c0_i32_0 = arith.constant 0 : i32
    %c0_i32_1 = arith.constant 0 : i32
    return %c0_i32, %c0_i32_0 : i32, i32
  }
  func.func @transform_7(%arg0: i32) -> (i32, i32) {
    %c0_i32 = arith.constant 0 : i32
    %c0_i32_0 = arith.constant 0 : i32
    return %arg0, %c0_i32 : i32, i32
  }
}

</mosaic_0001>

<llo_original>
// kernel: tpu_custom_call.1
$region0: #{tpu_custom_call.1}
  #allocation0 [shape = 'u32[]', space=smem, size = 0x4, offset = 0x4, fixed_abs, tag = 'smem constant byte address 0x4 - core index']
  #allocation1 [shape = 'u32[144,128]{1,0:T(1,128)}', space=vmem, size = 0x12000, scoped, tag = 'internal scratch']
  %s0 = inlined_call_operand.hbm [shape: f32[16,256], index: 0, kind: input, shape index: {}]
  %s1 = inlined_call_operand.hbm [shape: f32[256,1024], index: 1, kind: input, shape index: {}]
  %s2 = inlined_call_operand.hbm [shape: f32[1,1024], index: 2, kind: input, shape index: {}]
  %s3 = inlined_call_operand.hbm [shape: f32[1024,512], index: 3, kind: input, shape index: {}]
  %s4 = inlined_call_operand.hbm [shape: f32[1,512], index: 4, kind: input, shape index: {}]
  %s5 = inlined_call_operand.hbm [shape: f32[512,128], index: 5, kind: input, shape index: {}]
  %s6 = inlined_call_operand.hbm [shape: f32[1,128], index: 6, kind: input, shape index: {}]
  %s7 = inlined_call_operand.hbm [shape: f32[16,128], index: 7, kind: output, shape index: {}]
  %s8 = sld [smem:[#allocation0]]
  $region89: #{tpu_custom_call.1} parent=0
    _
  %s10 = ssub.s32 1, %s8
  %s11 = scalar_select 0, %s10, %s8
  $region1: #{tpu_custom_call.1} parent=0
    #allocation2 [shape = 'u8[16384]{0}', space=vmem, size = 0x4000, scoped, tag = 'input window, operand 0']
    #allocation3 [shape = 's32[2]{0}', space=sflag, size = 0x8, scoped, tag = 'scoped memory for tpu_custom_call.1']
    #allocation4 [shape = 's32[2]{0}', space=sflag, size = 0x8, scoped, tag = 'scoped memory for tpu_custom_call.1']
    #allocation5 [shape = 'u8[1048576]{0}', space=vmem, size = 0x100000, scoped, tag = 'input window, operand 1, single buffered']
    #allocation6 [shape = 's32[1]{0}', space=sflag, size = 0x4, scoped, tag = 'scoped memory for tpu_custom_call.1']
    #allocation7 [shape = 'u8[4096]{0}', space=vmem, size = 0x1000, scoped, tag = 'input window, operand 2, single buffered']
    #allocation8 [shape = 'u8[2097152]{0}', space=vmem, size = 0x200000, scoped, tag = 'input window, operand 3, single buffered']
    #allocation9 [shape = 's32[1]{0}', space=sflag, size = 0x4, scoped, tag = 'scoped memory for tpu_custom_call.1']
    #allocation10 [shape = 'u8[2048]{0}', space=vmem, size = 0x800, scoped, tag = 'input window, operand 4, single buffered']
    #allocation11 [shape = 'u8[262144]{0}', space=vmem, size = 0x40000, scoped, tag = 'input window, operand 5, single buffered']
    #allocation12 [shape = 's32[1]{0}', space=sflag, size = 0x4, scoped, tag = 'scoped memory for tpu_custom_call.1']
    #allocation13 [shape = 'u8[512]{0}', space=vmem, size = 0x400, scoped, tag = 'input window, operand 6, single buffered']
    #allocation14 [shape = 'u8[8192]{0}', space=vmem, size = 0x2000, scoped, tag = 'output window, operand 0']
    %12 = vsyncpa [#allocation3], 0
    %s13 = scalar_lea.sflag [#allocation3], 1
    %14 = vsyncpa %s13, 0
    %15 = vsyncpa [#allocation6], 0
    %16 = vsyncpa [#allocation9], 0
    %17 = vsyncpa [#allocation12], 0
    %18 = vsyncpa [#allocation4], 0
    %s19 = scalar_lea.sflag [#allocation4], 1
    %20 = vsyncpa %s19, 0
    loop: start=0, step=1, limit=4
    $region2: #{tpu_custom_call.1} parent=1 // loop_pre_header
      _
    $region3: #{tpu_custom_call.1} parent=1 // loop_header
      %s22 = sphi 0, %s26
      %p23 = scmp.ge.s32.totalorder %s22, 4
      %s32 = sphi 0, %s34
      %s35 = sphi 0, %s32
      %s36 = sphi 0, %s35
      %s52 = sphi 0, %s36
      %s56 = sphi 0, %s56
      %s58 = sphi 0, %s56
      %s59 = sphi 0, %s58
      %s73 = sphi 0, %s59
      %s77 = sphi 0, %s77
      %s79 = sphi 0, %s77
      %s80 = sphi 0, %s79
      %s94 = sphi 0, %s80
      %s98 = sphi 0, %s98
      %s100 = sphi 0, %s98
      %s101 = sphi 0, %s100
      %s115 = sphi 0, %s101
      %s119 = sphi 0, %s119
      %s121 = sphi 0, %s119
      %s122 = sphi 0, %s121
      %s136 = sphi 0, %s122
      %s140 = sphi 0, %s140
      %s142 = sphi 0, %s140
      %s143 = sphi 0, %s142
      %s157 = sphi 0, %s143
      %s161 = sphi 0, %s161
      %s163 = sphi 0, %s161
      %s164 = sphi 0, %s163
      %s178 = sphi 0, %s164
      %s184 = sphi 0, %s186
      %s187 = sphi 0, %s184
      %s188 = sphi 0, %s187
      %s204 = sphi 0, %s188
    $region4: #{tpu_custom_call.1} parent=1 // loop_header_branch
      %25 = sbr.rel (%p23) target = $region8
    $region5: #{tpu_custom_call.1} parent=1 // loop_body
      %s27 = ssub.s32 %s22, 1
      %s28 = ssub.s32 %s22, 2
      %s29 = sadd.s32 %s22, 1
      %s30 = ssub.s32 %s22, %s29
      %p31 = scmp.eq.s32.totalorder %s30, 0
      %s33 = sadd.s32 %s32, 1
      %s34 = scalar_select %p31, %s32, %s33
      %p37 = pneg %p31
      %p38 = scmp.eq.s32.totalorder %s22, 1
      %p39 = por %p37, %p38
      %p40 = scmp.ne.s32.totalorder %s32, %s35
      %p41 = scmp.eq.s32.totalorder %s22, 0
      %p42 = por %p40, %p41
      %p43 = scmp.ne.s32.totalorder %s32, %s35
      %p44 = scmp.eq.s32.totalorder %s27, 1
      %p45 = por %p43, %p44
      %p46 = scmp.ne.s32.totalorder %s35, %s36
      %p47 = scmp.eq.s32.totalorder %s27, 0
      %p48 = por %p46, %p47
      %p49 = scmp.ne.s32.totalorder %s35, %s36
      %p50 = scmp.eq.s32.totalorder %s28, 1
      %p51 = por %p49, %p50
      %p53 = scmp.ne.s32.totalorder %s36, %s52
      %p54 = scmp.eq.s32.totalorder %s28, 0
      %p55 = por %p53, %p54
      %s57 = sadd.s32 %s56, 1
      %p60 = scmp.eq.s32.totalorder %s22, 1
      %p61 = scmp.ne.s32.totalorder %s56, %s58
      %p62 = scmp.eq.s32.totalorder %s22, 0
      %p63 = por %p61, %p62
      %p64 = scmp.ne.s32.totalorder %s56, %s58
      %p65 = scmp.eq.s32.totalorder %s27, 1
      %p66 = por %p64, %p65
      %p67 = scmp.ne.s32.totalorder %s58, %s59
      %p68 = scmp.eq.s32.totalorder %s27, 0
      %p69 = por %p67, %p68
      %p70 = scmp.ne.s32.totalorder %s58, %s59
      %p71 = scmp.eq.s32.totalorder %s28, 1
      %p72 = por %p70, %p71
      %p74 = scmp.ne.s32.totalorder %s59, %s73
      %p75 = scmp.eq.s32.totalorder %s28, 0
      %p76 = por %p74, %p75
      %s78 = sadd.s32 %s77, 1
      %p81 = scmp.eq.s32.totalorder %s22, 1
      %p82 = scmp.ne.s32.totalorder %s77, %s79
      %p83 = scmp.eq.s32.totalorder %s22, 0
      %p84 = por %p82, %p83
      %p85 = scmp.ne.s32.totalorder %s77, %s79
      %p86 = scmp.eq.s32.totalorder %s27, 1
      %p87 = por %p85, %p86
      %p88 = scmp.ne.s32.totalorder %s79, %s80
      %p89 = scmp.eq.s32.totalorder %s27, 0
      %p90 = por %p88, %p89
      %p91 = scmp.ne.s32.totalorder %s79, %s80
      %p92 = scmp.eq.s32.totalorder %s28, 1
      %p93 = por %p91, %p92
      %p95 = scmp.ne.s32.totalorder %s80, %s94
      %p96 = scmp.eq.s32.totalorder %s28, 0
      %p97 = por %p95, %p96
      %s99 = sadd.s32 %s98, 1
      %p102 = scmp.eq.s32.totalorder %s22, 1
      %p103 = scmp.ne.s32.totalorder %s98, %s100
      %p104 = scmp.eq.s32.totalorder %s22, 0
      %p105 = por %p103, %p104
      %p106 = scmp.ne.s32.totalorder %s98, %s100
      %p107 = scmp.eq.s32.totalorder %s27, 1
      %p108 = por %p106, %p107
      %p109 = scmp.ne.s32.totalorder %s100, %s101
      %p110 = scmp.eq.s32.totalorder %s27, 0
      %p111 = por %p109, %p110
      %p112 = scmp.ne.s32.totalorder %s100, %s101
      %p113 = scmp.eq.s32.totalorder %s28, 1
      %p114 = por %p112, %p113
      %p116 = scmp.ne.s32.totalorder %s101, %s115
      %p117 = scmp.eq.s32.totalorder %s28, 0
      %p118 = por %p116, %p117
      %s120 = sadd.s32 %s119, 1
      %p123 = scmp.eq.s32.totalorder %s22, 1
      %p124 = scmp.ne.s32.totalorder %s119, %s121
      %p125 = scmp.eq.s32.totalorder %s22, 0
      %p126 = por %p124, %p125
      %p127 = scmp.ne.s32.totalorder %s119, %s121
      %p128 = scmp.eq.s32.totalorder %s27, 1
      %p129 = por %p127, %p128
      %p130 = scmp.ne.s32.totalorder %s121, %s122
      %p131 = scmp.eq.s32.totalorder %s27, 0
      %p132 = por %p130, %p131
      %p133 = scmp.ne.s32.totalorder %s121, %s122
      %p134 = scmp.eq.s32.totalorder %s28, 1
      %p135 = por %p133, %p134
      %p137 = scmp.ne.s32.totalorder %s122, %s136
      %p138 = scmp.eq.s32.totalorder %s28, 0
      %p139 = por %p137, %p138
      %s141 = sadd.s32 %s140, 1
      %p144 = scmp.eq.s32.totalorder %s22, 1
      %p145 = scmp.ne.s32.totalorder %s140, %s142
      %p146 = scmp.eq.s32.totalorder %s22, 0
      %p147 = por %p145, %p146
      %p148 = scmp.ne.s32.totalorder %s140, %s142
      %p149 = scmp.eq.s32.totalorder %s27, 1
      %p150 = por %p148, %p149
      %p151 = scmp.ne.s32.totalorder %s142, %s143
      %p152 = scmp.eq.s32.totalorder %s27, 0
      %p153 = por %p151, %p152
      %p154 = scmp.ne.s32.totalorder %s142, %s143
      %p155 = scmp.eq.s32.totalorder %s28, 1
      %p156 = por %p154, %p155
      %p158 = scmp.ne.s32.totalorder %s143, %s157
      %p159 = scmp.eq.s32.totalorder %s28, 0
      %p160 = por %p158, %p159
      %s162 = sadd.s32 %s161, 1
      %p165 = scmp.eq.s32.totalorder %s22, 1
      %p166 = scmp.ne.s32.totalorder %s161, %s163
      %p167 = scmp.eq.s32.totalorder %s22, 0
      %p168 = por %p166, %p167
      %p169 = scmp.ne.s32.totalorder %s161, %s163
      %p170 = scmp.eq.s32.totalorder %s27, 1
      %p171 = por %p169, %p170
      %p172 = scmp.ne.s32.totalorder %s163, %s164
      %p173 = scmp.eq.s32.totalorder %s27, 0
      %p174 = por %p172, %p173
      %p175 = scmp.ne.s32.totalorder %s163, %s164
      %p176 = scmp.eq.s32.totalorder %s28, 1
      %p177 = por %p175, %p176
      %p179 = scmp.ne.s32.totalorder %s164, %s178
      %p180 = scmp.eq.s32.totalorder %s28, 0
      %p181 = por %p179, %p180
      %s182 = ssub.s32 %s22, %s29
      %p183 = scmp.eq.s32.totalorder %s182, 0
      %s185 = sadd.s32 %s184, 1
      %s186 = scalar_select %p183, %s184, %s185
      %p189 = pneg %p183
      %p190 = scmp.eq.s32.totalorder %s22, 1
      %p191 = por %p189, %p190
      %p192 = scmp.ne.s32.totalorder %s184, %s187
      %p193 = scmp.eq.s32.totalorder %s22, 0
      %p194 = por %p192, %p193
      %p195 = scmp.ne.s32.totalorder %s184, %s187
      %p196 = scmp.eq.s32.totalorder %s27, 1
      %p197 = por %p195, %p196
      %p198 = scmp.ne.s32.totalorder %s187, %s188
      %p199 = scmp.eq.s32.totalorder %s27, 0
      %p200 = por %p198, %p199
      %p201 = scmp.ne.s32.totalorder %s187, %s188
      %p202 = scmp.eq.s32.totalorder %s28, 1
      %p203 = por %p201, %p202
      %p205 = scmp.ne.s32.totalorder %s188, %s204
      %p206 = scmp.eq.s32.totalorder %s28, 0
      %p207 = por %p205, %p206
      %p208 = scmp.le.s32.totalorder 1, %s22
      %p209 = scmp.lt.s32.totalorder %s22, 3
      %p210 = pnand %p208, %p209
      %p211 = pneg %p210
      // Predicated region
      $region9: #{tpu_custom_call.1} parent=5 // pred_check
        _
      $region10: #{tpu_custom_call.1} parent=5 // pred_check_branch
        %213 = sbr.rel (%p210) target = $region12
      $region11: #{tpu_custom_call.1} parent=5 // pred_region
        %s214 = ssub.s32 %s22, 1
        // Predicated region
        $region13: #{tpu_custom_call.1} parent=11 // pred_check
          %p215 = pneg %p69
        $region14: #{tpu_custom_call.1} parent=11 // pred_check_branch
          %217 = sbr.rel (%p215) target = $region16
        $region15: #{tpu_custom_call.1} parent=11 // pred_region
          %s219 = ssub.s32 32768, 32768
          %220 = vsyncadd [#allocation6], %s219
          %s221 = sshll.u32 [#allocation5], 4
          %s222 = int_to_ptr.vmem [resolvable:$true] %s221
          %227 = dma.hbm_to_vmem [thread:$0]  %s1, 32768, %s222, [#allocation6], 1024, 1024, 64
        $region16: #{tpu_custom_call.1} parent=11 // pred_fallthru
          _
        // Predicated region
        $region17: #{tpu_custom_call.1} parent=11 // pred_check
          %p228 = pneg %p90
        $region18: #{tpu_custom_call.1} parent=11 // pred_check_branch
          %230 = sbr.rel (%p228) target = $region20
        $region19: #{tpu_custom_call.1} parent=11 // pred_region
          %s232 = ssub.s32 128, 128
          %233 = vsyncadd [#allocation6], %s232
          %s235 = sshll.u32 [#allocation7], 4
          %s236 = int_to_ptr.vmem [resolvable:$true] %s235
          %238 = dma.hbm_to_vmem [thread:$0]  %s2, 128, %s236, [#allocation6]
        $region20: #{tpu_custom_call.1} parent=11 // pred_fallthru
          _
        // Predicated region
        $region21: #{tpu_custom_call.1} parent=11 // pred_check
          %p239 = pneg %p111
        $region22: #{tpu_custom_call.1} parent=11 // pred_check_branch
          %241 = sbr.rel (%p239) target = $region24
        $region23: #{tpu_custom_call.1} parent=11 // pred_region
          %s243 = ssub.s32 65536, 65536
          %244 = vsyncadd [#allocation9], %s243
          %s245 = sshll.u32 [#allocation8], 4
          %s246 = int_to_ptr.vmem [resolvable:$true] %s245
          %251 = dma.hbm_to_vmem [thread:$0]  %s3, 65536, %s246, [#allocation9], 512, 512, 32
        $region24: #{tpu_custom_call.1} parent=11 // pred_fallthru
          _
        // Predicated region
        $region25: #{tpu_custom_call.1} parent=11 // pred_check
          %p252 = pneg %p132
        $region26: #{tpu_custom_call.1} parent=11 // pred_check_branch
          %254 = sbr.rel (%p252) target = $region28
        $region27: #{tpu_custom_call.1} parent=11 // pred_region
          %s256 = ssub.s32 64, 64
          %257 = vsyncadd [#allocation9], %s256
          %s259 = sshll.u32 [#allocation10], 4
          %s260 = int_to_ptr.vmem [resolvable:$true] %s259
          %262 = dma.hbm_to_vmem [thread:$0]  %s4, 64, %s260, [#allocation9]
        $region28: #{tpu_custom_call.1} parent=11 // pred_fallthru
          _
        // Predicated region
        $region29: #{tpu_custom_call.1} parent=11 // pred_check
          %p263 = pneg %p153
        $region30: #{tpu_custom_call.1} parent=11 // pred_check_branch
          %265 = sbr.rel (%p263) target = $region32
        $region31: #{tpu_custom_call.1} parent=11 // pred_region
          %s267 = ssub.s32 8192, 8192
          %268 = vsyncadd [#allocation12], %s267
          %s269 = sshll.u32 [#allocation11], 4
          %s270 = int_to_ptr.vmem [resolvable:$true] %s269
          %275 = dma.hbm_to_vmem [thread:$0]  %s5, 8192, %s270, [#allocation12], 128, 128, 8
        $region32: #{tpu_custom_call.1} parent=11 // pred_fallthru
          _
        // Predicated region
        $region33: #{tpu_custom_call.1} parent=11 // pred_check
          %p276 = pneg %p174
        $region34: #{tpu_custom_call.1} parent=11 // pred_check_branch
          %278 = sbr.rel (%p276) target = $region36
        $region35: #{tpu_custom_call.1} parent=11 // pred_region
          %s280 = ssub.s32 16, 16
          %281 = vsyncadd [#allocation12], %s280
          %s283 = sshll.u32 [#allocation13], 4
          %s284 = int_to_ptr.vmem [resolvable:$true] %s283
          %286 = dma.hbm_to_vmem [thread:$0]  %s6, 16, %s284, [#allocation12]
        $region36: #{tpu_custom_call.1} parent=11 // pred_fallthru
          _
      $region12: #{tpu_custom_call.1} parent=5 // pred_fallthru
        _
      %p287 = scmp.lt.s32.totalorder %s22, 2
      // Predicated region
      $region37: #{tpu_custom_call.1} parent=5 // pred_check
        %p288 = pneg %p287
      $region38: #{tpu_custom_call.1} parent=5 // pred_check_branch
        %290 = sbr.rel (%p288) target = $region40
      $region39: #{tpu_custom_call.1} parent=5 // pred_region
        // Predicated region
        $region41: #{tpu_custom_call.1} parent=39 // pred_check
          %p291 = pneg %p42
        $region42: #{tpu_custom_call.1} parent=39 // pred_check_branch
          %293 = sbr.rel (%p291) target = $region44
        $region43: #{tpu_custom_call.1} parent=39 // pred_region
          %s294 = sand.u32 %s32, 1
          %s295 = scalar_lea.sflag [#allocation3], %s294
          %s296 = sand.u32 %s32, 1
          %s297 = smul.addr %s296, 16
          %s298 = scalar_lea.vmem [#allocation2], %s297
          %s300 = ssub.s32 256, 256
          %301 = vsyncadd %s295, %s300
          %s302 = smul.addr %s22, 2
          %s303 = smul.addr %s302, 128
          %s304 = scalar_lea.hbm %s0, %s303
          %s306 = sshll.u32 %s298, 4
          %s307 = int_to_ptr.vmem [resolvable:$true] %s306
          %309 = dma.hbm_to_vmem [thread:$0]  %s304, 256, %s307, %s295
        $region44: #{tpu_custom_call.1} parent=39 // pred_fallthru
          _
      $region40: #{tpu_custom_call.1} parent=5 // pred_fallthru
        _
      %p310 = scmp.le.s32.totalorder 1, %s22
      %p311 = scmp.lt.s32.totalorder %s22, 3
      %p312 = pnand %p310, %p311
      %p313 = pneg %p312
      // Predicated region
      $region45: #{tpu_custom_call.1} parent=5 // pred_check
        _
      $region46: #{tpu_custom_call.1} parent=5 // pred_check_branch
        %315 = sbr.rel (%p312) target = $region48
      $region47: #{tpu_custom_call.1} parent=5 // pred_region
        %s316 = ssub.s32 %s22, 1
        %s317 = sand.u32 %s35, 1
        %s318 = scalar_lea.sflag [#allocation3], %s317
        %s319 = sand.u32 %s35, 1
        %s320 = smul.addr %s319, 16
        %s321 = scalar_lea.vmem [#allocation2], %s320
        // Predicated region
        $region49: #{tpu_custom_call.1} parent=47 // pred_check
          %p322 = pneg %p48
        $region50: #{tpu_custom_call.1} parent=47 // pred_check_branch
          %324 = sbr.rel (%p322) target = $region52
        $region51: #{tpu_custom_call.1} parent=47 // pred_region
          %325 = dma.done %s318, 256
        $region52: #{tpu_custom_call.1} parent=47 // pred_fallthru
          _
        // Predicated region
        $region53: #{tpu_custom_call.1} parent=47 // pred_check
          %p326 = pneg %p69
        $region54: #{tpu_custom_call.1} parent=47 // pred_check_branch
          %328 = sbr.rel (%p326) target = $region56
        $region55: #{tpu_custom_call.1} parent=47 // pred_region
          %329 = dma.done [#allocation6], 32768
        $region56: #{tpu_custom_call.1} parent=47 // pred_fallthru
          _
        // Predicated region
        $region57: #{tpu_custom_call.1} parent=47 // pred_check
          %p330 = pneg %p90
        $region58: #{tpu_custom_call.1} parent=47 // pred_check_branch
          %332 = sbr.rel (%p330) target = $region60
        $region59: #{tpu_custom_call.1} parent=47 // pred_region
          %333 = dma.done [#allocation6], 128
        $region60: #{tpu_custom_call.1} parent=47 // pred_fallthru
          _
        // Predicated region
        $region61: #{tpu_custom_call.1} parent=47 // pred_check
          %p334 = pneg %p111
        $region62: #{tpu_custom_call.1} parent=47 // pred_check_branch
          %336 = sbr.rel (%p334) target = $region64
        $region63: #{tpu_custom_call.1} parent=47 // pred_region
          %337 = dma.done [#allocation9], 65536
        $region64: #{tpu_custom_call.1} parent=47 // pred_fallthru
          _
        // Predicated region
        $region65: #{tpu_custom_call.1} parent=47 // pred_check
          %p338 = pneg %p132
        $region66: #{tpu_custom_call.1} parent=47 // pred_check_branch
          %340 = sbr.rel (%p338) target = $region68
        $region67: #{tpu_custom_call.1} parent=47 // pred_region
          %341 = dma.done [#allocation9], 64
        $region68: #{tpu_custom_call.1} parent=47 // pred_fallthru
          _
        // Predicated region
        $region69: #{tpu_custom_call.1} parent=47 // pred_check
          %p342 = pneg %p153
        $region70: #{tpu_custom_call.1} parent=47 // pred_check_branch
          %344 = sbr.rel (%p342) target = $region72
        $region71: #{tpu_custom_call.1} parent=47 // pred_region
          %345 = dma.done [#allocation12], 8192
        $region72: #{tpu_custom_call.1} parent=47 // pred_fallthru
          _
        // Predicated region
        $region73: #{tpu_custom_call.1} parent=47 // pred_check
          %p346 = pneg %p174
        $region74: #{tpu_custom_call.1} parent=47 // pred_check_branch
          %348 = sbr.rel (%p346) target = $region76
        $region75: #{tpu_custom_call.1} parent=47 // pred_region
          %349 = dma.done [#allocation12], 16
        $region76: #{tpu_custom_call.1} parent=47 // pred_fallthru
          _
        %s350 = sand.u32 %s35, 1
        %s351 = scalar_lea.sflag [#allocation3], %s350
        %s352 = sand.u32 %s35, 1
        %s353 = smul.addr %s352, 16
        %s354 = scalar_lea.vmem [#allocation2], %s353
        %p355 = pneg %p48
        %p356 = pneg %p45
        %p357 = pneg %p69
        %p358 = pneg %p66
        %p359 = pneg %p90
        %p360 = pneg %p87
        %p361 = pneg %p111
        %p362 = pneg %p108
        %p363 = pneg %p132
        %p364 = pneg %p129
        %p365 = pneg %p153
        %p366 = pneg %p150
        %p367 = pneg %p174
        %p368 = pneg %p171
        %p369 = pneg %p200
        %p370 = pneg %p197
        %s371 = sand.u32 %s187, 1
        %s372 = scalar_lea.sflag [#allocation4], %s371
        %s373 = sand.u32 %s187, 1
        %s374 = smul.addr %s373, 8
        %s375 = scalar_lea.vmem [#allocation14], %s374
        %v376 = vld [vmem:[%s321] sm:$0xff]
        %v377 = vld [vmem:[%s321 + $0x8] sm:$0xff]
        %v378 = vld [vmem:[#allocation5] sm:$0xff]
        %v379 = vld [vmem:[#allocation5 + $0x8] sm:$0xff]
        %v380 = vld [vmem:[#allocation5 + $0x10] sm:$0xff]
        %v381 = vld [vmem:[#allocation5 + $0x18] sm:$0xff]
        %v382 = vld [vmem:[#allocation5 + $0x20] sm:$0xff]
        %v383 = vld [vmem:[#allocation5 + $0x28] sm:$0xff]
        %v384 = vld [vmem:[#allocation5 + $0x30] sm:$0xff]
        %v385 = vld [vmem:[#allocation5 + $0x38] sm:$0xff]
        %v386 = vld [vmem:[#allocation5 + $0x40] sm:$0xff]
        %v387 = vld [vmem:[#allocation5 + $0x48] sm:$0xff]
        %v388 = vld [vmem:[#allocation5 + $0x50] sm:$0xff]
        %v389 = vld [vmem:[#allocation5 + $0x58] sm:$0xff]
        %v390 = vld [vmem:[#allocation5 + $0x60] sm:$0xff]
        %v391 = vld [vmem:[#allocation5 + $0x68] sm:$0xff]
        %v392 = vld [vmem:[#allocation5 + $0x70] sm:$0xff]
        %v393 = vld [vmem:[#allocation5 + $0x78] sm:$0xff]
        %v394 = vld [vmem:[#allocation5 + $0x80] sm:$0xff]
        %v395 = vld [vmem:[#allocation5 + $0x88] sm:$0xff]
        %v396 = vld [vmem:[#allocation5 + $0x90] sm:$0xff]
        %v397 = vld [vmem:[#allocation5 + $0x98] sm:$0xff]
        %v398 = vld [vmem:[#allocation5 + $0xa0] sm:$0xff]
        %v399 = vld [vmem:[#allocation5 + $0xa8] sm:$0xff]
        %v400 = vld [vmem:[#allocation5 + $0xb0] sm:$0xff]
        %v401 = vld [vmem:[#allocation5 + $0xb8] sm:$0xff]
        %v402 = vld [vmem:[#allocation5 + $0xc0] sm:$0xff]
        %v403 = vld [vmem:[#allocation5 + $0xc8] sm:$0xff]
        %v404 = vld [vmem:[#allocation5 + $0xd0] sm:$0xff]
        %v405 = vld [vmem:[#allocation5 + $0xd8] sm:$0xff]
        %v406 = vld [vmem:[#allocation5 + $0xe0] sm:$0xff]
        %v407 = vld [vmem:[#allocation5 + $0xe8] sm:$0xff]
        %v408 = vld [vmem:[#allocation5 + $0xf0] sm:$0xff]
        %v409 = vld [vmem:[#allocation5 + $0xf8] sm:$0xff]
        %v410 = vld [vmem:[#allocation5 + $0x100] sm:$0xff]
        %v411 = vld [vmem:[#allocation5 + $0x108] sm:$0xff]
        %v412 = vld [vmem:[#allocation5 + $0x110] sm:$0xff]
        %v413 = vld [vmem:[#allocation5 + $0x118] sm:$0xff]
        %v414 = vld [vmem:[#allocation5 + $0x120] sm:$0xff]
        %v415 = vld [vmem:[#allocation5 + $0x128] sm:$0xff]
        %v416 = vld [vmem:[#allocation5 + $0x130] sm:$0xff]
        %v417 = vld [vmem:[#allocation5 + $0x138] sm:$0xff]
        %v418 = vld [vmem:[#allocation5 + $0x140] sm:$0xff]
        %v419 = vld [vmem:[#allocation5 + $0x148] sm:$0xff]
        %v420 = vld [vmem:[#allocation5 + $0x150] sm:$0xff]
        %v421 = vld [vmem:[#allocation5 + $0x158] sm:$0xff]
        %v422 = vld [vmem:[#allocation5 + $0x160] sm:$0xff]
        %v423 = vld [vmem:[#allocation5 + $0x168] sm:$0xff]
        %v424 = vld [vmem:[#allocation5 + $0x170] sm:$0xff]
        %v425 = vld [vmem:[#allocation5 + $0x178] sm:$0xff]
        %v426 = vld [vmem:[#allocation5 + $0x180] sm:$0xff]
        %v427 = vld [vmem:[#allocation5 + $0x188] sm:$0xff]
        %v428 = vld [vmem:[#allocation5 + $0x190] sm:$0xff]
        %v429 = vld [vmem:[#allocation5 + $0x198] sm:$0xff]
        %v430 = vld [vmem:[#allocation5 + $0x1a0] sm:$0xff]
        %v431 = vld [vmem:[#allocation5 + $0x1a8] sm:$0xff]
        %v432 = vld [vmem:[#allocation5 + $0x1b0] sm:$0xff]
        %v433 = vld [vmem:[#allocation5 + $0x1b8] sm:$0xff]
        %v434 = vld [vmem:[#allocation5 + $0x1c0] sm:$0xff]
        %v435 = vld [vmem:[#allocation5 + $0x1c8] sm:$0xff]
        %v436 = vld [vmem:[#allocation5 + $0x1d0] sm:$0xff]
        %v437 = vld [vmem:[#allocation5 + $0x1d8] sm:$0xff]
        %v438 = vld [vmem:[#allocation5 + $0x1e0] sm:$0xff]
        %v439 = vld [vmem:[#allocation5 + $0x1e8] sm:$0xff]
        %v440 = vld [vmem:[#allocation5 + $0x1f0] sm:$0xff]
        %v441 = vld [vmem:[#allocation5 + $0x1f8] sm:$0xff]
        %v442 = vld [vmem:[#allocation5 + $0x200] sm:$0xff]
        %v443 = vld [vmem:[#allocation5 + $0x208] sm:$0xff]
        %v444 = vld [vmem:[#allocation5 + $0x210] sm:$0xff]
        %v445 = vld [vmem:[#allocation5 + $0x218] sm:$0xff]
        %v446 = vld [vmem:[#allocation5 + $0x220] sm:$0xff]
        %v447 = vld [vmem:[#allocation5 + $0x228] sm:$0xff]
        %v448 = vld [vmem:[#allocation5 + $0x230] sm:$0xff]
        %v449 = vld [vmem:[#allocation5 + $0x238] sm:$0xff]
        %v450 = vld [vmem:[#allocation5 + $0x240] sm:$0xff]
        %v451 = vld [vmem:[#allocation5 + $0x248] sm:$0xff]
        %v452 = vld [vmem:[#allocation5 + $0x250] sm:$0xff]
        %v453 = vld [vmem:[#allocation5 + $0x258] sm:$0xff]
        %v454 = vld [vmem:[#allocation5 + $0x260] sm:$0xff]
        %v455 = vld [vmem:[#allocation5 + $0x268] sm:$0xff]
        %v456 = vld [vmem:[#allocation5 + $0x270] sm:$0xff]
        %v457 = vld [vmem:[#allocation5 + $0x278] sm:$0xff]
        %v458 = vld [vmem:[#allocation5 + $0x280] sm:$0xff]
        %v459 = vld [vmem:[#allocation5 + $0x288] sm:$0xff]
        %v460 = vld [vmem:[#allocation5 + $0x290] sm:$0xff]
        %v461 = vld [vmem:[#allocation5 + $0x298] sm:$0xff]
        %v462 = vld [vmem:[#allocation5 + $0x2a0] sm:$0xff]
        %v463 = vld [vmem:[#allocation5 + $0x2a8] sm:$0xff]
        %v464 = vld [vmem:[#allocation5 + $0x2b0] sm:$0xff]
        %v465 = vld [vmem:[#allocation5 + $0x2b8] sm:$0xff]
        %v466 = vld [vmem:[#allocation5 + $0x2c0] sm:$0xff]
        %v467 = vld [vmem:[#allocation5 + $0x2c8] sm:$0xff]
        %v468 = vld [vmem:[#allocation5 + $0x2d0] sm:$0xff]
        %v469 = vld [vmem:[#allocation5 + $0x2d8] sm:$0xff]
        %v470 = vld [vmem:[#allocation5 + $0x2e0] sm:$0xff]
        %v471 = vld [vmem:[#allocation5 + $0x2e8] sm:$0xff]
        %v472 = vld [vmem:[#allocation5 + $0x2f0] sm:$0xff]
        %v473 = vld [vmem:[#allocation5 + $0x2f8] sm:$0xff]
        %v474 = vld [vmem:[#allocation5 + $0x300] sm:$0xff]
        %v475 = vld [vmem:[#allocation5 + $0x308] sm:$0xff]
        %v476 = vld [vmem:[#allocation5 + $0x310] sm:$0xff]
        %v477 = vld [vmem:[#allocation5 + $0x318] sm:$0xff]
        %v478 = vld [vmem:[#allocation5 + $0x320] sm:$0xff]
        %v479 = vld [vmem:[#allocation5 + $0x328] sm:$0xff]
        %v480 = vld [vmem:[#allocation5 + $0x330] sm:$0xff]
        %v481 = vld [vmem:[#allocation5 + $0x338] sm:$0xff]
        %v482 = vld [vmem:[#allocation5 + $0x340] sm:$0xff]
        %v483 = vld [vmem:[#allocation5 + $0x348] sm:$0xff]
        %v484 = vld [vmem:[#allocation5 + $0x350] sm:$0xff]
        %v485 = vld [vmem:[#allocation5 + $0x358] sm:$0xff]
        %v486 = vld [vmem:[#allocation5 + $0x360] sm:$0xff]
        %v487 = vld [vmem:[#allocation5 + $0x368] sm:$0xff]
        %v488 = vld [vmem:[#allocation5 + $0x370] sm:$0xff]
        %v489 = vld [vmem:[#allocation5 + $0x378] sm:$0xff]
        %v490 = vld [vmem:[#allocation5 + $0x380] sm:$0xff]
        %v491 = vld [vmem:[#allocation5 + $0x388] sm:$0xff]
        %v492 = vld [vmem:[#allocation5 + $0x390] sm:$0xff]
        %v493 = vld [vmem:[#allocation5 + $0x398] sm:$0xff]
        %v494 = vld [vmem:[#allocation5 + $0x3a0] sm:$0xff]
        %v495 = vld [vmem:[#allocation5 + $0x3a8] sm:$0xff]
        %v496 = vld [vmem:[#allocation5 + $0x3b0] sm:$0xff]
        %v497 = vld [vmem:[#allocation5 + $0x3b8] sm:$0xff]
        %v498 = vld [vmem:[#allocation5 + $0x3c0] sm:$0xff]
        %v499 = vld [vmem:[#allocation5 + $0x3c8] sm:$0xff]
        %v500 = vld [vmem:[#allocation5 + $0x3d0] sm:$0xff]
        %v501 = vld [vmem:[#allocation5 + $0x3d8] sm:$0xff]
        %v502 = vld [vmem:[#allocation5 + $0x3e0] sm:$0xff]
        %v503 = vld [vmem:[#allocation5 + $0x3e8] sm:$0xff]
        %v504 = vld [vmem:[#allocation5 + $0x3f0] sm:$0xff]
        %v505 = vld [vmem:[#allocation5 + $0x3f8] sm:$0xff]
        %v506 = vld [vmem:[#allocation5 + $0x400] sm:$0xff]
        %v507 = vld [vmem:[#allocation5 + $0x408] sm:$0xff]
        %v508 = vld [vmem:[#allocation5 + $0x410] sm:$0xff]
        %v509 = vld [vmem:[#allocation5 + $0x418] sm:$0xff]
        %v510 = vld [vmem:[#allocation5 + $0x420] sm:$0xff]
        %v511 = vld [vmem:[#allocation5 + $0x428] sm:$0xff]
        %v512 = vld [vmem:[#allocation5 + $0x430] sm:$0xff]
        %v513 = vld [vmem:[#allocation5 + $0x438] sm:$0xff]
        %v514 = vld [vmem:[#allocation5 + $0x440] sm:$0xff]
        %v515 = vld [vmem:[#allocation5 + $0x448] sm:$0xff]
        %v516 = vld [vmem:[#allocation5 + $0x450] sm:$0xff]
        %v517 = vld [vmem:[#allocation5 + $0x458] sm:$0xff]
        %v518 = vld [vmem:[#allocation5 + $0x460] sm:$0xff]
        %v519 = vld [vmem:[#allocation5 + $0x468] sm:$0xff]
        %v520 = vld [vmem:[#allocation5 + $0x470] sm:$0xff]
        %v521 = vld [vmem:[#allocation5 + $0x478] sm:$0xff]
        %v522 = vld [vmem:[#allocation5 + $0x480] sm:$0xff]
        %v523 = vld [vmem:[#allocation5 + $0x488] sm:$0xff]
        %v524 = vld [vmem:[#allocation5 + $0x490] sm:$0xff]
        %v525 = vld [vmem:[#allocation5 + $0x498] sm:$0xff]
        %v526 = vld [vmem:[#allocation5 + $0x4a0] sm:$0xff]
        %v527 = vld [vmem:[#allocation5 + $0x4a8] sm:$0xff]
        %v528 = vld [vmem:[#allocation5 + $0x4b0] sm:$0xff]
        %v529 = vld [vmem:[#allocation5 + $0x4b8] sm:$0xff]
        %v530 = vld [vmem:[#allocation5 + $0x4c0] sm:$0xff]
        %v531 = vld [vmem:[#allocation5 + $0x4c8] sm:$0xff]
        %v532 = vld [vmem:[#allocation5 + $0x4d0] sm:$0xff]
        %v533 = vld [vmem:[#allocation5 + $0x4d8] sm:$0xff]
        %v534 = vld [vmem:[#allocation5 + $0x4e0] sm:$0xff]
        %v535 = vld [vmem:[#allocation5 + $0x4e8] sm:$0xff]
        %v536 = vld [vmem:[#allocation5 + $0x4f0] sm:$0xff]
        %v537 = vld [vmem:[#allocation5 + $0x4f8] sm:$0xff]
        %v538 = vld [vmem:[#allocation5 + $0x500] sm:$0xff]
        %v539 = vld [vmem:[#allocation5 + $0x508] sm:$0xff]
        %v540 = vld [vmem:[#allocation5 + $0x510] sm:$0xff]
        %v541 = vld [vmem:[#allocation5 + $0x518] sm:$0xff]
        %v542 = vld [vmem:[#allocation5 + $0x520] sm:$0xff]
        %v543 = vld [vmem:[#allocation5 + $0x528] sm:$0xff]
        %v544 = vld [vmem:[#allocation5 + $0x530] sm:$0xff]
        %v545 = vld [vmem:[#allocation5 + $0x538] sm:$0xff]
        %v546 = vld [vmem:[#allocation5 + $0x540] sm:$0xff]
        %v547 = vld [vmem:[#allocation5 + $0x548] sm:$0xff]
        %v548 = vld [vmem:[#allocation5 + $0x550] sm:$0xff]
        %v549 = vld [vmem:[#allocation5 + $0x558] sm:$0xff]
        %v550 = vld [vmem:[#allocation5 + $0x560] sm:$0xff]
        %v551 = vld [vmem:[#allocation5 + $0x568] sm:$0xff]
        %v552 = vld [vmem:[#allocation5 + $0x570] sm:$0xff]
        %v553 = vld [vmem:[#allocation5 + $0x578] sm:$0xff]
        %v554 = vld [vmem:[#allocation5 + $0x580] sm:$0xff]
        %v555 = vld [vmem:[#allocation5 + $0x588] sm:$0xff]
        %v556 = vld [vmem:[#allocation5 + $0x590] sm:$0xff]
        %v557 = vld [vmem:[#allocation5 + $0x598] sm:$0xff]
        %v558 = vld [vmem:[#allocation5 + $0x5a0] sm:$0xff]
        %v559 = vld [vmem:[#allocation5 + $0x5a8] sm:$0xff]
        %v560 = vld [vmem:[#allocation5 + $0x5b0] sm:$0xff]
        %v561 = vld [vmem:[#allocation5 + $0x5b8] sm:$0xff]
        %v562 = vld [vmem:[#allocation5 + $0x5c0] sm:$0xff]
        %v563 = vld [vmem:[#allocation5 + $0x5c8] sm:$0xff]
        %v564 = vld [vmem:[#allocation5 + $0x5d0] sm:$0xff]
        %v565 = vld [vmem:[#allocation5 + $0x5d8] sm:$0xff]
        %v566 = vld [vmem:[#allocation5 + $0x5e0] sm:$0xff]
        %v567 = vld [vmem:[#allocation5 + $0x5e8] sm:$0xff]
        %v568 = vld [vmem:[#allocation5 + $0x5f0] sm:$0xff]
        %v569 = vld [vmem:[#allocation5 + $0x5f8] sm:$0xff]
        %v570 = vld [vmem:[#allocation5 + $0x600] sm:$0xff]
        %v571 = vld [vmem:[#allocation5 + $0x608] sm:$0xff]
        %v572 = vld [vmem:[#allocation5 + $0x610] sm:$0xff]
        %v573 = vld [vmem:[#allocation5 + $0x618] sm:$0xff]
        %v574 = vld [vmem:[#allocation5 + $0x620] sm:$0xff]
        %v575 = vld [vmem:[#allocation5 + $0x628] sm:$0xff]
        %v576 = vld [vmem:[#allocation5 + $0x630] sm:$0xff]
        %v577 = vld [vmem:[#allocation5 + $0x638] sm:$0xff]
        %v578 = vld [vmem:[#allocation5 + $0x640] sm:$0xff]
        %v579 = vld [vmem:[#allocation5 + $0x648] sm:$0xff]
        %v580 = vld [vmem:[#allocation5 + $0x650] sm:$0xff]
        %v581 = vld [vmem:[#allocation5 + $0x658] sm:$0xff]
        %v582 = vld [vmem:[#allocation5 + $0x660] sm:$0xff]
        %v583 = vld [vmem:[#allocation5 + $0x668] sm:$0xff]
        %v584 = vld [vmem:[#allocation5 + $0x670] sm:$0xff]
        %v585 = vld [vmem:[#allocation5 + $0x678] sm:$0xff]
        %v586 = vld [vmem:[#allocation5 + $0x680] sm:$0xff]
        %v587 = vld [vmem:[#allocation5 + $0x688] sm:$0xff]
        %v588 = vld [vmem:[#allocation5 + $0x690] sm:$0xff]
        %v589 = vld [vmem:[#allocation5 + $0x698] sm:$0xff]
        %v590 = vld [vmem:[#allocation5 + $0x6a0] sm:$0xff]
        %v591 = vld [vmem:[#allocation5 + $0x6a8] sm:$0xff]
        %v592 = vld [vmem:[#allocation5 + $0x6b0] sm:$0xff]
        %v593 = vld [vmem:[#allocation5 + $0x6b8] sm:$0xff]
        %v594 = vld [vmem:[#allocation5 + $0x6c0] sm:$0xff]
        %v595 = vld [vmem:[#allocation5 + $0x6c8] sm:$0xff]
        %v596 = vld [vmem:[#allocation5 + $0x6d0] sm:$0xff]
        %v597 = vld [vmem:[#allocation5 + $0x6d8] sm:$0xff]
        %v598 = vld [vmem:[#allocation5 + $0x6e0] sm:$0xff]
        %v599 = vld [vmem:[#allocation5 + $0x6e8] sm:$0xff]
        %v600 = vld [vmem:[#allocation5 + $0x6f0] sm:$0xff]
        %v601 = vld [vmem:[#allocation5 + $0x6f8] sm:$0xff]
        %v602 = vld [vmem:[#allocation5 + $0x700] sm:$0xff]
        %v603 = vld [vmem:[#allocation5 + $0x708] sm:$0xff]
        %v604 = vld [vmem:[#allocation5 + $0x710] sm:$0xff]
        %v605 = vld [vmem:[#allocation5 + $0x718] sm:$0xff]
        %v606 = vld [vmem:[#allocation5 + $0x720] sm:$0xff]
        %v607 = vld [vmem:[#allocation5 + $0x728] sm:$0xff]
        %v608 = vld [vmem:[#allocation5 + $0x730] sm:$0xff]
        %v609 = vld [vmem:[#allocation5 + $0x738] sm:$0xff]
        %v610 = vld [vmem:[#allocation5 + $0x740] sm:$0xff]
        %v611 = vld [vmem:[#allocation5 + $0x748] sm:$0xff]
        %v612 = vld [vmem:[#allocation5 + $0x750] sm:$0xff]
        %v613 = vld [vmem:[#allocation5 + $0x758] sm:$0xff]
        %v614 = vld [vmem:[#allocation5 + $0x760] sm:$0xff]
        %v615 = vld [vmem:[#allocation5 + $0x768] sm:$0xff]
        %v616 = vld [vmem:[#allocation5 + $0x770] sm:$0xff]
        %v617 = vld [vmem:[#allocation5 + $0x778] sm:$0xff]
        %v618 = vld [vmem:[#allocation5 + $0x780] sm:$0xff]
        %v619 = vld [vmem:[#allocation5 + $0x788] sm:$0xff]
        %v620 = vld [vmem:[#allocation5 + $0x790] sm:$0xff]
        %v621 = vld [vmem:[#allocation5 + $0x798] sm:$0xff]
        %v622 = vld [vmem:[#allocation5 + $0x7a0] sm:$0xff]
        %v623 = vld [vmem:[#allocation5 + $0x7a8] sm:$0xff]
        %v624 = vld [vmem:[#allocation5 + $0x7b0] sm:$0xff]
        %v625 = vld [vmem:[#allocation5 + $0x7b8] sm:$0xff]
        %v626 = vld [vmem:[#allocation5 + $0x7c0] sm:$0xff]
        %v627 = vld [vmem:[#allocation5 + $0x7c8] sm:$0xff]
        %v628 = vld [vmem:[#allocation5 + $0x7d0] sm:$0xff]
        %v629 = vld [vmem:[#allocation5 + $0x7d8] sm:$0xff]
        %v630 = vld [vmem:[#allocation5 + $0x7e0] sm:$0xff]
        %v631 = vld [vmem:[#allocation5 + $0x7e8] sm:$0xff]
        %v632 = vld [vmem:[#allocation5 + $0x7f0] sm:$0xff]
        %v633 = vld [vmem:[#allocation5 + $0x7f8] sm:$0xff]
        %v634 = vld [vmem:[#allocation7] sm:$0xff]
        %v636 = vlaneseq
        %v637 = vshrl.u32 %v636, 7
        %v638 = vsub.s32 0, %v637
        %v639 = vrot.slane %v634, %v638
        %v640 = vlaneseq
        %v641 = vshrl.u32 %v640, 7
        %v642 = vsub.s32 1, %v641
        %v643 = vrot.slane %v634, %v642
        %v644 = vlaneseq
        %v645 = vshrl.u32 %v644, 7
        %v646 = vsub.s32 2, %v645
        %v647 = vrot.slane %v634, %v646
        %v648 = vlaneseq
        %v649 = vshrl.u32 %v648, 7
        %v650 = vsub.s32 3, %v649
        %v651 = vrot.slane %v634, %v650
        %v652 = vlaneseq
        %v653 = vshrl.u32 %v652, 7
        %v654 = vsub.s32 4, %v653
        %v655 = vrot.slane %v634, %v654
        %v656 = vlaneseq
        %v657 = vshrl.u32 %v656, 7
        %v658 = vsub.s32 5, %v657
        %v659 = vrot.slane %v634, %v658
        %v660 = vlaneseq
        %v661 = vshrl.u32 %v660, 7
        %v662 = vsub.s32 6, %v661
        %v663 = vrot.slane %v634, %v662
        %v664 = vlaneseq
        %v665 = vshrl.u32 %v664, 7
        %v666 = vsub.s32 7, %v665
        %v667 = vrot.slane %v634, %v666
        %676 = vmatprep.subr.mxu0 %v499
        %677 = vmatpush1.msra.mxu0 %v498
        %678 = vmatprep.subr.mxu0 %v491
        %679 = vmatpush1.msra.mxu0 %v490
        %680 = vmatprep.subr.mxu0 %v483
        %681 = vmatpush1.msra.mxu0 %v482
        %682 = vmatprep.subr.mxu0 %v475
        %683 = vmatpush1.msra.mxu0 %v474
        %684 = vmatprep.subr.mxu0 %v467
        %685 = vmatpush1.msra.mxu0 %v466
        %686 = vmatprep.subr.mxu0 %v459
        %687 = vmatpush1.msra.mxu0 %v458
        %688 = vmatprep.subr.mxu0 %v451
        %689 = vmatpush1.msra.mxu0 %v450
        %690 = vmatprep.subr.mxu0 %v443
        %691 = vmatpush1.msra.mxu0 %v442
        %692 = vmatprep.subr.mxu0 %v435
        %693 = vmatpush1.msra.mxu0 %v434
        %694 = vmatprep.subr.mxu0 %v427
        %695 = vmatpush1.msra.mxu0 %v426
        %696 = vmatprep.subr.mxu0 %v419
        %697 = vmatpush1.msra.mxu0 %v418
        %698 = vmatprep.subr.mxu0 %v411
        %699 = vmatpush1.msra.mxu0 %v410
        %700 = vmatprep.subr.mxu0 %v403
        %701 = vmatpush1.msra.mxu0 %v402
        %702 = vmatprep.subr.mxu0 %v395
        %703 = vmatpush1.msra.mxu0 %v394
        %704 = vmatprep.subr.mxu0 %v387
        %705 = vmatpush1.msra.mxu0 %v386
        %706 = vmatprep.subr.mxu0 %v379
        %707 = vmatpush1.msra.mxu0 %v378
        %708 = vmatprep.subr.mxu0 %v627
        %709 = vmatpush2.msra.mxu0 %v626
        %710 = vmatprep.subr.mxu0 %v619
        %711 = vmatpush2.msra.mxu0 %v618
        %712 = vmatprep.subr.mxu0 %v611
        %713 = vmatpush2.msra.mxu0 %v610
        %714 = vmatprep.subr.mxu0 %v603
        %715 = vmatpush2.msra.mxu0 %v602
        %716 = vmatprep.subr.mxu0 %v595
        %717 = vmatpush2.msra.mxu0 %v594
        %718 = vmatprep.subr.mxu0 %v587
        %719 = vmatpush2.msra.mxu0 %v586
        %720 = vmatprep.subr.mxu0 %v579
        %721 = vmatpush2.msra.mxu0 %v578
        %722 = vmatprep.subr.mxu0 %v571
        %723 = vmatpush2.msra.mxu0 %v570
        %724 = vmatprep.subr.mxu0 %v563
        %725 = vmatpush2.msra.mxu0 %v562
        %726 = vmatprep.subr.mxu0 %v555
        %727 = vmatpush2.msra.mxu0 %v554
        %728 = vmatprep.subr.mxu0 %v547
        %729 = vmatpush2.msra.mxu0 %v546
        %730 = vmatprep.subr.mxu0 %v539
        %731 = vmatpush2.msra.mxu0 %v538
        %732 = vmatprep.subr.mxu0 %v531
        %733 = vmatpush2.msra.mxu0 %v530
        %734 = vmatprep.subr.mxu0 %v523
        %735 = vmatpush2.msra.mxu0 %v522
        %736 = vmatprep.subr.mxu0 %v515
        %737 = vmatpush2.msra.mxu0 %v514
        %738 = vmatprep.subr.mxu0 %v507
        %739 = vmatpush2.msra.mxu0 %v506
        %740 = vmatprep.mubr.f32.mxu0 %v377
        %741 = vmatmul.mubr.f32.gmra.mxu0 %v376
        %v742 = vpop.f32.mrf.mxu0
        %v743 = vadd.f32 %v639, %v742
        %v744 = vpop.f32.mrf.mxu0
        %v745 = vadd.f32 %v643, %v744
        %746 = vdwg.mxu0
        %747 = vmatprep.subr.mxu0 %v501
        %748 = vmatpush1.msra.mxu0 %v500
        %749 = vmatprep.subr.mxu0 %v493
        %750 = vmatpush1.msra.mxu0 %v492
        %751 = vmatprep.subr.mxu0 %v485
        %752 = vmatpush1.msra.mxu0 %v484
        %753 = vmatprep.subr.mxu0 %v477
        %754 = vmatpush1.msra.mxu0 %v476
        %755 = vmatprep.subr.mxu0 %v469
        %756 = vmatpush1.msra.mxu0 %v468
        %757 = vmatprep.subr.mxu0 %v461
        %758 = vmatpush1.msra.mxu0 %v460
        %759 = vmatprep.subr.mxu0 %v453
        %760 = vmatpush1.msra.mxu0 %v452
        %761 = vmatprep.subr.mxu0 %v445
        %762 = vmatpush1.msra.mxu0 %v444
        %763 = vmatprep.subr.mxu0 %v437
        %764 = vmatpush1.msra.mxu0 %v436
        %765 = vmatprep.subr.mxu0 %v429
        %766 = vmatpush1.msra.mxu0 %v428
        %767 = vmatprep.subr.mxu0 %v421
        %768 = vmatpush1.msra.mxu0 %v420
        %769 = vmatprep.subr.mxu0 %v413
        %770 = vmatpush1.msra.mxu0 %v412
        %771 = vmatprep.subr.mxu0 %v405
        %772 = vmatpush1.msra.mxu0 %v404
        %773 = vmatprep.subr.mxu0 %v397
        %774 = vmatpush1.msra.mxu0 %v396
        %775 = vmatprep.subr.mxu0 %v389
        %776 = vmatpush1.msra.mxu0 %v388
        %777 = vmatprep.subr.mxu0 %v381
        %778 = vmatpush1.msra.mxu0 %v380
        %779 = vmatprep.subr.mxu0 %v629
        %780 = vmatpush2.msra.mxu0 %v628
        %781 = vmatprep.subr.mxu0 %v621
        %782 = vmatpush2.msra.mxu0 %v620
        %783 = vmatprep.subr.mxu0 %v613
        %784 = vmatpush2.msra.mxu0 %v612
        %785 = vmatprep.subr.mxu0 %v605
        %786 = vmatpush2.msra.mxu0 %v604
        %787 = vmatprep.subr.mxu0 %v597
        %788 = vmatpush2.msra.mxu0 %v596
        %789 = vmatprep.subr.mxu0 %v589
        %790 = vmatpush2.msra.mxu0 %v588
        %791 = vmatprep.subr.mxu0 %v581
        %792 = vmatpush2.msra.mxu0 %v580
        %793 = vmatprep.subr.mxu0 %v573
        %794 = vmatpush2.msra.mxu0 %v572
        %795 = vmatprep.subr.mxu0 %v565
        %796 = vmatpush2.msra.mxu0 %v564
        %797 = vmatprep.subr.mxu0 %v557
        %798 = vmatpush2.msra.mxu0 %v556
        %799 = vmatprep.subr.mxu0 %v549
        %800 = vmatpush2.msra.mxu0 %v548
        %801 = vmatprep.subr.mxu0 %v541
        %802 = vmatpush2.msra.mxu0 %v540
        %803 = vmatprep.subr.mxu0 %v533
        %804 = vmatpush2.msra.mxu0 %v532
        %805 = vmatprep.subr.mxu0 %v525
        %806 = vmatpush2.msra.mxu0 %v524
        %807 = vmatprep.subr.mxu0 %v517
        %808 = vmatpush2.msra.mxu0 %v516
        %809 = vmatprep.subr.mxu0 %v509
        %810 = vmatpush2.msra.mxu0 %v508
        %811 = vmatprep.mubr.f32.mxu0 %v377
        %812 = vmatmul.mubr.f32.gmra.mxu0 %v376
        %v813 = vpop.f32.mrf.mxu0
        %v814 = vadd.f32 %v647, %v813
        %v815 = vpop.f32.mrf.mxu0
        %v816 = vadd.f32 %v651, %v815
        %817 = vdwg.mxu0
        %818 = vmatprep.subr.mxu0 %v503
        %819 = vmatpush1.msra.mxu0 %v502
        %820 = vmatprep.subr.mxu0 %v495
        %821 = vmatpush1.msra.mxu0 %v494
        %822 = vmatprep.subr.mxu0 %v487
        %823 = vmatpush1.msra.mxu0 %v486
        %824 = vmatprep.subr.mxu0 %v479
        %825 = vmatpush1.msra.mxu0 %v478
        %826 = vmatprep.subr.mxu0 %v471
        %827 = vmatpush1.msra.mxu0 %v470
        %828 = vmatprep.subr.mxu0 %v463
        %829 = vmatpush1.msra.mxu0 %v462
        %830 = vmatprep.subr.mxu0 %v455
        %831 = vmatpush1.msra.mxu0 %v454
        %832 = vmatprep.subr.mxu0 %v447
        %833 = vmatpush1.msra.mxu0 %v446
        %834 = vmatprep.subr.mxu0 %v439
        %835 = vmatpush1.msra.mxu0 %v438
        %836 = vmatprep.subr.mxu0 %v431
        %837 = vmatpush1.msra.mxu0 %v430
        %838 = vmatprep.subr.mxu0 %v423
        %839 = vmatpush1.msra.mxu0 %v422
        %840 = vmatprep.subr.mxu0 %v415
        %841 = vmatpush1.msra.mxu0 %v414
        %842 = vmatprep.subr.mxu0 %v407
        %843 = vmatpush1.msra.mxu0 %v406
        %844 = vmatprep.subr.mxu0 %v399
        %845 = vmatpush1.msra.mxu0 %v398
        %846 = vmatprep.subr.mxu0 %v391
        %847 = vmatpush1.msra.mxu0 %v390
        %848 = vmatprep.subr.mxu0 %v383
        %849 = vmatpush1.msra.mxu0 %v382
        %850 = vmatprep.subr.mxu0 %v631
        %851 = vmatpush2.msra.mxu0 %v630
        %852 = vmatprep.subr.mxu0 %v623
        %853 = vmatpush2.msra.mxu0 %v622
        %854 = vmatprep.subr.mxu0 %v615
        %855 = vmatpush2.msra.mxu0 %v614
        %856 = vmatprep.subr.mxu0 %v607
        %857 = vmatpush2.msra.mxu0 %v606
        %858 = vmatprep.subr.mxu0 %v599
        %859 = vmatpush2.msra.mxu0 %v598
        %860 = vmatprep.subr.mxu0 %v591
        %861 = vmatpush2.msra.mxu0 %v590
        %862 = vmatprep.subr.mxu0 %v583
        %863 = vmatpush2.msra.mxu0 %v582
        %864 = vmatprep.subr.mxu0 %v575
        %865 = vmatpush2.msra.mxu0 %v574
        %866 = vmatprep.subr.mxu0 %v567
        %867 = vmatpush2.msra.mxu0 %v566
        %868 = vmatprep.subr.mxu0 %v559
        %869 = vmatpush2.msra.mxu0 %v558
        %870 = vmatprep.subr.mxu0 %v551
        %871 = vmatpush2.msra.mxu0 %v550
        %872 = vmatprep.subr.mxu0 %v543
        %873 = vmatpush2.msra.mxu0 %v542
        %874 = vmatprep.subr.mxu0 %v535
        %875 = vmatpush2.msra.mxu0 %v534
        %876 = vmatprep.subr.mxu0 %v527
        %877 = vmatpush2.msra.mxu0 %v526
        %878 = vmatprep.subr.mxu0 %v519
        %879 = vmatpush2.msra.mxu0 %v518
        %880 = vmatprep.subr.mxu0 %v511
        %881 = vmatpush2.msra.mxu0 %v510
        %882 = vmatprep.mubr.f32.mxu0 %v377
        %883 = vmatmul.mubr.f32.gmra.mxu0 %v376
        %v884 = vpop.f32.mrf.mxu0
        %v885 = vadd.f32 %v655, %v884
        %v886 = vpop.f32.mrf.mxu0
        %v887 = vadd.f32 %v659, %v886
        %888 = vdwg.mxu0
        %889 = vmatprep.subr.mxu0 %v505
        %890 = vmatpush1.msra.mxu0 %v504
        %891 = vmatprep.subr.mxu0 %v497
        %892 = vmatpush1.msra.mxu0 %v496
        %893 = vmatprep.subr.mxu0 %v489
        %894 = vmatpush1.msra.mxu0 %v488
        %895 = vmatprep.subr.mxu0 %v481
        %896 = vmatpush1.msra.mxu0 %v480
        %897 = vmatprep.subr.mxu0 %v473
        %898 = vmatpush1.msra.mxu0 %v472
        %899 = vmatprep.subr.mxu0 %v465
        %900 = vmatpush1.msra.mxu0 %v464
        %901 = vmatprep.subr.mxu0 %v457
        %902 = vmatpush1.msra.mxu0 %v456
        %903 = vmatprep.subr.mxu0 %v449
        %904 = vmatpush1.msra.mxu0 %v448
        %905 = vmatprep.subr.mxu0 %v441
        %906 = vmatpush1.msra.mxu0 %v440
        %907 = vmatprep.subr.mxu0 %v433
        %908 = vmatpush1.msra.mxu0 %v432
        %909 = vmatprep.subr.mxu0 %v425
        %910 = vmatpush1.msra.mxu0 %v424
        %911 = vmatprep.subr.mxu0 %v417
        %912 = vmatpush1.msra.mxu0 %v416
        %913 = vmatprep.subr.mxu0 %v409
        %914 = vmatpush1.msra.mxu0 %v408
        %915 = vmatprep.subr.mxu0 %v401
        %916 = vmatpush1.msra.mxu0 %v400
        %917 = vmatprep.subr.mxu0 %v393
        %918 = vmatpush1.msra.mxu0 %v392
        %919 = vmatprep.subr.mxu0 %v385
        %920 = vmatpush1.msra.mxu0 %v384
        %921 = vmatprep.subr.mxu0 %v633
        %922 = vmatpush2.msra.mxu0 %v632
        %923 = vmatprep.subr.mxu0 %v625
        %924 = vmatpush2.msra.mxu0 %v624
        %925 = vmatprep.subr.mxu0 %v617
        %926 = vmatpush2.msra.mxu0 %v616
        %927 = vmatprep.subr.mxu0 %v609
        %928 = vmatpush2.msra.mxu0 %v608
        %929 = vmatprep.subr.mxu0 %v601
        %930 = vmatpush2.msra.mxu0 %v600
        %931 = vmatprep.subr.mxu0 %v593
        %932 = vmatpush2.msra.mxu0 %v592
        %933 = vmatprep.subr.mxu0 %v585
        %934 = vmatpush2.msra.mxu0 %v584
        %935 = vmatprep.subr.mxu0 %v577
        %936 = vmatpush2.msra.mxu0 %v576
        %937 = vmatprep.subr.mxu0 %v569
        %938 = vmatpush2.msra.mxu0 %v568
        %939 = vmatprep.subr.mxu0 %v561
        %940 = vmatpush2.msra.mxu0 %v560
        %941 = vmatprep.subr.mxu0 %v553
        %942 = vmatpush2.msra.mxu0 %v552
        %943 = vmatprep.subr.mxu0 %v545
        %944 = vmatpush2.msra.mxu0 %v544
        %945 = vmatprep.subr.mxu0 %v537
        %946 = vmatpush2.msra.mxu0 %v536
        %947 = vmatprep.subr.mxu0 %v529
        %948 = vmatpush2.msra.mxu0 %v528
        %949 = vmatprep.subr.mxu0 %v521
        %950 = vmatpush2.msra.mxu0 %v520
        %951 = vmatprep.subr.mxu0 %v513
        %952 = vmatpush2.msra.mxu0 %v512
        %953 = vmatprep.mubr.f32.mxu0 %v377
        %954 = vmatmul.mubr.f32.gmra.mxu0 %v376
        %v955 = vpop.f32.mrf.mxu0
        %v956 = vadd.f32 %v663, %v955
        %v957 = vpop.f32.mrf.mxu0
        %v958 = vadd.f32 %v667, %v957
        %959 = vdwg.mxu0
        %v960 = vmax.f32 %v743, 0.0
        %v961 = vmax.f32 %v745, 0.0
        %v962 = vmax.f32 %v814, 0.0
        %v963 = vmax.f32 %v816, 0.0
        %v964 = vmax.f32 %v885, 0.0
        %v965 = vmax.f32 %v887, 0.0
        %v966 = vmax.f32 %v956, 0.0
        %v967 = vmax.f32 %v958, 0.0
        %v968 = vld [vmem:[#allocation8] sm:$0xff]
        %v969 = vld [vmem:[#allocation8 + $0x8] sm:$0xff]
        %v970 = vld [vmem:[#allocation8 + $0x10] sm:$0xff]
        %v971 = vld [vmem:[#allocation8 + $0x18] sm:$0xff]
        %v972 = vld [vmem:[#allocation8 + $0x20] sm:$0xff]
        %v973 = vld [vmem:[#allocation8 + $0x28] sm:$0xff]
        %v974 = vld [vmem:[#allocation8 + $0x30] sm:$0xff]
        %v975 = vld [vmem:[#allocation8 + $0x38] sm:$0xff]
        %v976 = vld [vmem:[#allocation8 + $0x40] sm:$0xff]
        %v977 = vld [vmem:[#allocation8 + $0x48] sm:$0xff]
        %v978 = vld [vmem:[#allocation8 + $0x50] sm:$0xff]
        %v979 = vld [vmem:[#allocation8 + $0x58] sm:$0xff]
        %v980 = vld [vmem:[#allocation8 + $0x60] sm:$0xff]
        %v981 = vld [vmem:[#allocation8 + $0x68] sm:$0xff]
        %v982 = vld [vmem:[#allocation8 + $0x70] sm:$0xff]
        %v983 = vld [vmem:[#allocation8 + $0x78] sm:$0xff]
        %v984 = vld [vmem:[#allocation8 + $0x80] sm:$0xff]
        %v985 = vld [vmem:[#allocation8 + $0x88] sm:$0xff]
        %v986 = vld [vmem:[#allocation8 + $0x90] sm:$0xff]
        %v987 = vld [vmem:[#allocation8 + $0x98] sm:$0xff]
        %v988 = vld [vmem:[#allocation8 + $0xa0] sm:$0xff]
        %v989 = vld [vmem:[#allocation8 + $0xa8] sm:$0xff]
        %v990 = vld [vmem:[#allocation8 + $0xb0] sm:$0xff]
        %v991 = vld [vmem:[#allocation8 + $0xb8] sm:$0xff]
        %v992 = vld [vmem:[#allocation8 + $0xc0] sm:$0xff]
        %v993 = vld [vmem:[#allocation8 + $0xc8] sm:$0xff]
        %v994 = vld [vmem:[#allocation8 + $0xd0] sm:$0xff]
        %v995 = vld [vmem:[#allocation8 + $0xd8] sm:$0xff]
        %v996 = vld [vmem:[#allocation8 + $0xe0] sm:$0xff]
        %v997 = vld [vmem:[#allocation8 + $0xe8] sm:$0xff]
        %v998 = vld [vmem:[#allocation8 + $0xf0] sm:$0xff]
        %v999 = vld [vmem:[#allocation8 + $0xf8] sm:$0xff]
        %v1000 = vld [vmem:[#allocation8 + $0x100] sm:$0xff]
        %v1001 = vld [vmem:[#allocation8 + $0x108] sm:$0xff]
        %v1002 = vld [vmem:[#allocation8 + $0x110] sm:$0xff]
        %v1003 = vld [vmem:[#allocation8 + $0x118] sm:$0xff]
        %v1004 = vld [vmem:[#allocation8 + $0x120] sm:$0xff]
        %v1005 = vld [vmem:[#allocation8 + $0x128] sm:$0xff]
        %v1006 = vld [vmem:[#allocation8 + $0x130] sm:$0xff]
        %v1007 = vld [vmem:[#allocation8 + $0x138] sm:$0xff]
        %v1008 = vld [vmem:[#allocation8 + $0x140] sm:$0xff]
        %v1009 = vld [vmem:[#allocation8 + $0x148] sm:$0xff]
        %v1010 = vld [vmem:[#allocation8 + $0x150] sm:$0xff]
        %v1011 = vld [vmem:[#allocation8 + $0x158] sm:$0xff]
        %v1012 = vld [vmem:[#allocation8 + $0x160] sm:$0xff]
        %v1013 = vld [vmem:[#allocation8 + $0x168] sm:$0xff]
        %v1014 = vld [vmem:[#allocation8 + $0x170] sm:$0xff]
        %v1015 = vld [vmem:[#allocation8 + $0x178] sm:$0xff]
        %v1016 = vld [vmem:[#allocation8 + $0x180] sm:$0xff]
        %v1017 = vld [vmem:[#allocation8 + $0x188] sm:$0xff]
        %v1018 = vld [vmem:[#allocation8 + $0x190] sm:$0xff]
        %v1019 = vld [vmem:[#allocation8 + $0x198] sm:$0xff]
        %v1020 = vld [vmem:[#allocation8 + $0x1a0] sm:$0xff]
        %v1021 = vld [vmem:[#allocation8 + $0x1a8] sm:$0xff]
        %v1022 = vld [vmem:[#allocation8 + $0x1b0] sm:$0xff]
        %v1023 = vld [vmem:[#allocation8 + $0x1b8] sm:$0xff]
        %v1024 = vld [vmem:[#allocation8 + $0x1c0] sm:$0xff]
        %v1025 = vld [vmem:[#allocation8 + $0x1c8] sm:$0xff]
        %v1026 = vld [vmem:[#allocation8 + $0x1d0] sm:$0xff]
        %v1027 = vld [vmem:[#allocation8 + $0x1d8] sm:$0xff]
        %v1028 = vld [vmem:[#allocation8 + $0x1e0] sm:$0xff]
        %v1029 = vld [vmem:[#allocation8 + $0x1e8] sm:$0xff]
        %v1030 = vld [vmem:[#allocation8 + $0x1f0] sm:$0xff]
        %v1031 = vld [vmem:[#allocation8 + $0x1f8] sm:$0xff]
        %v1032 = vld [vmem:[#allocation8 + $0x200] sm:$0xff]
        %v1033 = vld [vmem:[#allocation8 + $0x208] sm:$0xff]
        %v1034 = vld [vmem:[#allocation8 + $0x210] sm:$0xff]
        %v1035 = vld [vmem:[#allocation8 + $0x218] sm:$0xff]
        %v1036 = vld [vmem:[#allocation8 + $0x220] sm:$0xff]
        %v1037 = vld [vmem:[#allocation8 + $0x228] sm:$0xff]
        %v1038 = vld [vmem:[#allocation8 + $0x230] sm:$0xff]
        %v1039 = vld [vmem:[#allocation8 + $0x238] sm:$0xff]
        %v1040 = vld [vmem:[#allocation8 + $0x240] sm:$0xff]
        %v1041 = vld [vmem:[#allocation8 + $0x248] sm:$0xff]
        %v1042 = vld [vmem:[#allocation8 + $0x250] sm:$0xff]
        %v1043 = vld [vmem:[#allocation8 + $0x258] sm:$0xff]
        %v1044 = vld [vmem:[#allocation8 + $0x260] sm:$0xff]
        %v1045 = vld [vmem:[#allocation8 + $0x268] sm:$0xff]
        %v1046 = vld [vmem:[#allocation8 + $0x270] sm:$0xff]
        %v1047 = vld [vmem:[#allocation8 + $0x278] sm:$0xff]
        %v1048 = vld [vmem:[#allocation8 + $0x280] sm:$0xff]
        %v1049 = vld [vmem:[#allocation8 + $0x288] sm:$0xff]
        %v1050 = vld [vmem:[#allocation8 + $0x290] sm:$0xff]
        %v1051 = vld [vmem:[#allocation8 + $0x298] sm:$0xff]
        %v1052 = vld [vmem:[#allocation8 + $0x2a0] sm:$0xff]
        %v1053 = vld [vmem:[#allocation8 + $0x2a8] sm:$0xff]
        %v1054 = vld [vmem:[#allocation8 + $0x2b0] sm:$0xff]
        %v1055 = vld [vmem:[#allocation8 + $0x2b8] sm:$0xff]
        %v1056 = vld [vmem:[#allocation8 + $0x2c0] sm:$0xff]
        %v1057 = vld [vmem:[#allocation8 + $0x2c8] sm:$0xff]
        %v1058 = vld [vmem:[#allocation8 + $0x2d0] sm:$0xff]
        %v1059 = vld [vmem:[#allocation8 + $0x2d8] sm:$0xff]
        %v1060 = vld [vmem:[#allocation8 + $0x2e0] sm:$0xff]
        %v1061 = vld [vmem:[#allocation8 + $0x2e8] sm:$0xff]
        %v1062 = vld [vmem:[#allocation8 + $0x2f0] sm:$0xff]
        %v1063 = vld [vmem:[#allocation8 + $0x2f8] sm:$0xff]
        %v1064 = vld [vmem:[#allocation8 + $0x300] sm:$0xff]
        %v1065 = vld [vmem:[#allocation8 + $0x308] sm:$0xff]
        %v1066 = vld [vmem:[#allocation8 + $0x310] sm:$0xff]
        %v1067 = vld [vmem:[#allocation8 + $0x318] sm:$0xff]
        %v1068 = vld [vmem:[#allocation8 + $0x320] sm:$0xff]
        %v1069 = vld [vmem:[#allocation8 + $0x328] sm:$0xff]
        %v1070 = vld [vmem:[#allocation8 + $0x330] sm:$0xff]
        %v1071 = vld [vmem:[#allocation8 + $0x338] sm:$0xff]
        %v1072 = vld [vmem:[#allocation8 + $0x340] sm:$0xff]
        %v1073 = vld [vmem:[#allocation8 + $0x348] sm:$0xff]
        %v1074 = vld [vmem:[#allocation8 + $0x350] sm:$0xff]
        %v1075 = vld [vmem:[#allocation8 + $0x358] sm:$0xff]
        %v1076 = vld [vmem:[#allocation8 + $0x360] sm:$0xff]
        %v1077 = vld [vmem:[#allocation8 + $0x368] sm:$0xff]
        %v1078 = vld [vmem:[#allocation8 + $0x370] sm:$0xff]
        %v1079 = vld [vmem:[#allocation8 + $0x378] sm:$0xff]
        %v1080 = vld [vmem:[#allocation8 + $0x380] sm:$0xff]
        %v1081 = vld [vmem:[#allocation8 + $0x388] sm:$0xff]
        %v1082 = vld [vmem:[#allocation8 + $0x390] sm:$0xff]
        %v1083 = vld [vmem:[#allocation8 + $0x398] sm:$0xff]
        %v1084 = vld [vmem:[#allocation8 + $0x3a0] sm:$0xff]
        %v1085 = vld [vmem:[#allocation8 + $0x3a8] sm:$0xff]
        %v1086 = vld [vmem:[#allocation8 + $0x3b0] sm:$0xff]
        %v1087 = vld [vmem:[#allocation8 + $0x3b8] sm:$0xff]
        %v1088 = vld [vmem:[#allocation8 + $0x3c0] sm:$0xff]
        %v1089 = vld [vmem:[#allocation8 + $0x3c8] sm:$0xff]
        %v1090 = vld [vmem:[#allocation8 + $0x3d0] sm:$0xff]
        %v1091 = vld [vmem:[#allocation8 + $0x3d8] sm:$0xff]
        %v1092 = vld [vmem:[#allocation8 + $0x3e0] sm:$0xff]
        %v1093 = vld [vmem:[#allocation8 + $0x3e8] sm:$0xff]
        %v1094 = vld [vmem:[#allocation8 + $0x3f0] sm:$0xff]
        %v1095 = vld [vmem:[#allocation8 + $0x3f8] sm:$0xff]
        %v1096 = vld [vmem:[#allocation8 + $0x400] sm:$0xff]
        %v1097 = vld [vmem:[#allocation8 + $0x408] sm:$0xff]
        %v1098 = vld [vmem:[#allocation8 + $0x410] sm:$0xff]
        %v1099 = vld [vmem:[#allocation8 + $0x418] sm:$0xff]
        %v1100 = vld [vmem:[#allocation8 + $0x420] sm:$0xff]
        %v1101 = vld [vmem:[#allocation8 + $0x428] sm:$0xff]
        %v1102 = vld [vmem:[#allocation8 + $0x430] sm:$0xff]
        %v1103 = vld [vmem:[#allocation8 + $0x438] sm:$0xff]
        %v1104 = vld [vmem:[#allocation8 + $0x440] sm:$0xff]
        %v1105 = vld [vmem:[#allocation8 + $0x448] sm:$0xff]
        %v1106 = vld [vmem:[#allocation8 + $0x450] sm:$0xff]
        %v1107 = vld [vmem:[#allocation8 + $0x458] sm:$0xff]
        %v1108 = vld [vmem:[#allocation8 + $0x460] sm:$0xff]
        %v1109 = vld [vmem:[#allocation8 + $0x468] sm:$0xff]
        %v1110 = vld [vmem:[#allocation8 + $0x470] sm:$0xff]
        %v1111 = vld [vmem:[#allocation8 + $0x478] sm:$0xff]
        %v1112 = vld [vmem:[#allocation8 + $0x480] sm:$0xff]
        %v1113 = vld [vmem:[#allocation8 + $0x488] sm:$0xff]
        %v1114 = vld [vmem:[#allocation8 + $0x490] sm:$0xff]
        %v1115 = vld [vmem:[#allocation8 + $0x498] sm:$0xff]
        %v1116 = vld [vmem:[#allocation8 + $0x4a0] sm:$0xff]
        %v1117 = vld [vmem:[#allocation8 + $0x4a8] sm:$0xff]
        %v1118 = vld [vmem:[#allocation8 + $0x4b0] sm:$0xff]
        %v1119 = vld [vmem:[#allocation8 + $0x4b8] sm:$0xff]
        %v1120 = vld [vmem:[#allocation8 + $0x4c0] sm:$0xff]
        %v1121 = vld [vmem:[#allocation8 + $0x4c8] sm:$0xff]
        %v1122 = vld [vmem:[#allocation8 + $0x4d0] sm:$0xff]
        %v1123 = vld [vmem:[#allocation8 + $0x4d8] sm:$0xff]
        %v1124 = vld [vmem:[#allocation8 + $0x4e0] sm:$0xff]
        %v1125 = vld [vmem:[#allocation8 + $0x4e8] sm:$0xff]
        %v1126 = vld [vmem:[#allocation8 + $0x4f0] sm:$0xff]
        %v1127 = vld [vmem:[#allocation8 + $0x4f8] sm:$0xff]
        %v1128 = vld [vmem:[#allocation8 + $0x500] sm:$0xff]
        %v1129 = vld [vmem:[#allocation8 + $0x508] sm:$0xff]
        %v1130 = vld [vmem:[#allocation8 + $0x510] sm:$0xff]
        %v1131 = vld [vmem:[#allocation8 + $0x518] sm:$0xff]
        %v1132 = vld [vmem:[#allocation8 + $0x520] sm:$0xff]
        %v1133 = vld [vmem:[#allocation8 + $0x528] sm:$0xff]
        %v1134 = vld [vmem:[#allocation8 + $0x530] sm:$0xff]
        %v1135 = vld [vmem:[#allocation8 + $0x538] sm:$0xff]
        %v1136 = vld [vmem:[#allocation8 + $0x540] sm:$0xff]
        %v1137 = vld [vmem:[#allocation8 + $0x548] sm:$0xff]
        %v1138 = vld [vmem:[#allocation8 + $0x550] sm:$0xff]
        %v1139 = vld [vmem:[#allocation8 + $0x558] sm:$0xff]
        %v1140 = vld [vmem:[#allocation8 + $0x560] sm:$0xff]
        %v1141 = vld [vmem:[#allocation8 + $0x568] sm:$0xff]
        %v1142 = vld [vmem:[#allocation8 + $0x570] sm:$0xff]
        %v1143 = vld [vmem:[#allocation8 + $0x578] sm:$0xff]
        %v1144 = vld [vmem:[#allocation8 + $0x580] sm:$0xff]
        %v1145 = vld [vmem:[#allocation8 + $0x588] sm:$0xff]
        %v1146 = vld [vmem:[#allocation8 + $0x590] sm:$0xff]
        %v1147 = vld [vmem:[#allocation8 + $0x598] sm:$0xff]
        %v1148 = vld [vmem:[#allocation8 + $0x5a0] sm:$0xff]
        %v1149 = vld [vmem:[#allocation8 + $0x5a8] sm:$0xff]
        %v1150 = vld [vmem:[#allocation8 + $0x5b0] sm:$0xff]
        %v1151 = vld [vmem:[#allocation8 + $0x5b8] sm:$0xff]
        %v1152 = vld [vmem:[#allocation8 + $0x5c0] sm:$0xff]
        %v1153 = vld [vmem:[#allocation8 + $0x5c8] sm:$0xff]
        %v1154 = vld [vmem:[#allocation8 + $0x5d0] sm:$0xff]
        %v1155 = vld [vmem:[#allocation8 + $0x5d8] sm:$0xff]
        %v1156 = vld [vmem:[#allocation8 + $0x5e0] sm:$0xff]
        %v1157 = vld [vmem:[#allocation8 + $0x5e8] sm:$0xff]
        %v1158 = vld [vmem:[#allocation8 + $0x5f0] sm:$0xff]
        %v1159 = vld [vmem:[#allocation8 + $0x5f8] sm:$0xff]
        %v1160 = vld [vmem:[#allocation8 + $0x600] sm:$0xff]
        %v1161 = vld [vmem:[#allocation8 + $0x608] sm:$0xff]
        %v1162 = vld [vmem:[#allocation8 + $0x610] sm:$0xff]
        %v1163 = vld [vmem:[#allocation8 + $0x618] sm:$0xff]
        %v1164 = vld [vmem:[#allocation8 + $0x620] sm:$0xff]
        %v1165 = vld [vmem:[#allocation8 + $0x628] sm:$0xff]
        %v1166 = vld [vmem:[#allocation8 + $0x630] sm:$0xff]
        %v1167 = vld [vmem:[#allocation8 + $0x638] sm:$0xff]
        %v1168 = vld [vmem:[#allocation8 + $0x640] sm:$0xff]
        %v1169 = vld [vmem:[#allocation8 + $0x648] sm:$0xff]
        %v1170 = vld [vmem:[#allocation8 + $0x650] sm:$0xff]
        %v1171 = vld [vmem:[#allocation8 + $0x658] sm:$0xff]
        %v1172 = vld [vmem:[#allocation8 + $0x660] sm:$0xff]
        %v1173 = vld [vmem:[#allocation8 + $0x668] sm:$0xff]
        %v1174 = vld [vmem:[#allocation8 + $0x670] sm:$0xff]
        %v1175 = vld [vmem:[#allocation8 + $0x678] sm:$0xff]
        %v1176 = vld [vmem:[#allocation8 + $0x680] sm:$0xff]
        %v1177 = vld [vmem:[#allocation8 + $0x688] sm:$0xff]
        %v1178 = vld [vmem:[#allocation8 + $0x690] sm:$0xff]
        %v1179 = vld [vmem:[#allocation8 + $0x698] sm:$0xff]
        %v1180 = vld [vmem:[#allocation8 + $0x6a0] sm:$0xff]
        %v1181 = vld [vmem:[#allocation8 + $0x6a8] sm:$0xff]
        %v1182 = vld [vmem:[#allocation8 + $0x6b0] sm:$0xff]
        %v1183 = vld [vmem:[#allocation8 + $0x6b8] sm:$0xff]
        %v1184 = vld [vmem:[#allocation8 + $0x6c0] sm:$0xff]
        %v1185 = vld [vmem:[#allocation8 + $0x6c8] sm:$0xff]
        %v1186 = vld [vmem:[#allocation8 + $0x6d0] sm:$0xff]
        %v1187 = vld [vmem:[#allocation8 + $0x6d8] sm:$0xff]
        %v1188 = vld [vmem:[#allocation8 + $0x6e0] sm:$0xff]
        %v1189 = vld [vmem:[#allocation8 + $0x6e8] sm:$0xff]
        %v1190 = vld [vmem:[#allocation8 + $0x6f0] sm:$0xff]
        %v1191 = vld [vmem:[#allocation8 + $0x6f8] sm:$0xff]
        %v1192 = vld [vmem:[#allocation8 + $0x700] sm:$0xff]
        %v1193 = vld [vmem:[#allocation8 + $0x708] sm:$0xff]
        %v1194 = vld [vmem:[#allocation8 + $0x710] sm:$0xff]
        %v1195 = vld [vmem:[#allocation8 + $0x718] sm:$0xff]
        %v1196 = vld [vmem:[#allocation8 + $0x720] sm:$0xff]
        %v1197 = vld [vmem:[#allocation8 + $0x728] sm:$0xff]
        %v1198 = vld [vmem:[#allocation8 + $0x730] sm:$0xff]
        %v1199 = vld [vmem:[#allocation8 + $0x738] sm:$0xff]
        %v1200 = vld [vmem:[#allocation8 + $0x740] sm:$0xff]
        %v1201 = vld [vmem:[#allocation8 + $0x748] sm:$0xff]
        %v1202 = vld [vmem:[#allocation8 + $0x750] sm:$0xff]
        %v1203 = vld [vmem:[#allocation8 + $0x758] sm:$0xff]
        %v1204 = vld [vmem:[#allocation8 + $0x760] sm:$0xff]
        %v1205 = vld [vmem:[#allocation8 + $0x768] sm:$0xff]
        %v1206 = vld [vmem:[#allocation8 + $0x770] sm:$0xff]
        %v1207 = vld [vmem:[#allocation8 + $0x778] sm:$0xff]
        %v1208 = vld [vmem:[#allocation8 + $0x780] sm:$0xff]
        %v1209 = vld [vmem:[#allocation8 + $0x788] sm:$0xff]
        %v1210 = vld [vmem:[#allocation8 + $0x790] sm:$0xff]
        %v1211 = vld [vmem:[#allocation8 + $0x798] sm:$0xff]
        %v1212 = vld [vmem:[#allocation8 + $0x7a0] sm:$0xff]
        %v1213 = vld [vmem:[#allocation8 + $0x7a8] sm:$0xff]
        %v1214 = vld [vmem:[#allocation8 + $0x7b0] sm:$0xff]
        %v1215 = vld [vmem:[#allocation8 + $0x7b8] sm:$0xff]
        %v1216 = vld [vmem:[#allocation8 + $0x7c0] sm:$0xff]
        %v1217 = vld [vmem:[#allocation8 + $0x7c8] sm:$0xff]
        %v1218 = vld [vmem:[#allocation8 + $0x7d0] sm:$0xff]
        %v1219 = vld [vmem:[#allocation8 + $0x7d8] sm:$0xff]
        %v1220 = vld [vmem:[#allocation8 + $0x7e0] sm:$0xff]
        %v1221 = vld [vmem:[#allocation8 + $0x7e8] sm:$0xff]
        %v1222 = vld [vmem:[#allocation8 + $0x7f0] sm:$0xff]
        %v1223 = vld [vmem:[#allocation8 + $0x7f8] sm:$0xff]
        %v1224 = vld [vmem:[#allocation8 + $0x800] sm:$0xff]
        %v1225 = vld [vmem:[#allocation8 + $0x808] sm:$0xff]
        %v1226 = vld [vmem:[#allocation8 + $0x810] sm:$0xff]
        %v1227 = vld [vmem:[#allocation8 + $0x818] sm:$0xff]
        %v1228 = vld [vmem:[#allocation8 + $0x820] sm:$0xff]
        %v1229 = vld [vmem:[#allocation8 + $0x828] sm:$0xff]
        %v1230 = vld [vmem:[#allocation8 + $0x830] sm:$0xff]
        %v1231 = vld [vmem:[#allocation8 + $0x838] sm:$0xff]
        %v1232 = vld [vmem:[#allocation8 + $0x840] sm:$0xff]
        %v1233 = vld [vmem:[#allocation8 + $0x848] sm:$0xff]
        %v1234 = vld [vmem:[#allocation8 + $0x850] sm:$0xff]
        %v1235 = vld [vmem:[#allocation8 + $0x858] sm:$0xff]
        %v1236 = vld [vmem:[#allocation8 + $0x860] sm:$0xff]
        %v1237 = vld [vmem:[#allocation8 + $0x868] sm:$0xff]
        %v1238 = vld [vmem:[#allocation8 + $0x870] sm:$0xff]
        %v1239 = vld [vmem:[#allocation8 + $0x878] sm:$0xff]
        %v1240 = vld [vmem:[#allocation8 + $0x880] sm:$0xff]
        %v1241 = vld [vmem:[#allocation8 + $0x888] sm:$0xff]
        %v1242 = vld [vmem:[#allocation8 + $0x890] sm:$0xff]
        %v1243 = vld [vmem:[#allocation8 + $0x898] sm:$0xff]
        %v1244 = vld [vmem:[#allocation8 + $0x8a0] sm:$0xff]
        %v1245 = vld [vmem:[#allocation8 + $0x8a8] sm:$0xff]
        %v1246 = vld [vmem:[#allocation8 + $0x8b0] sm:$0xff]
        %v1247 = vld [vmem:[#allocation8 + $0x8b8] sm:$0xff]
        %v1248 = vld [vmem:[#allocation8 + $0x8c0] sm:$0xff]
        %v1249 = vld [vmem:[#allocation8 + $0x8c8] sm:$0xff]
        %v1250 = vld [vmem:[#allocation8 + $0x8d0] sm:$0xff]
        %v1251 = vld [vmem:[#allocation8 + $0x8d8] sm:$0xff]
        %v1252 = vld [vmem:[#allocation8 + $0x8e0] sm:$0xff]
        %v1253 = vld [vmem:[#allocation8 + $0x8e8] sm:$0xff]
        %v1254 = vld [vmem:[#allocation8 + $0x8f0] sm:$0xff]
        %v1255 = vld [vmem:[#allocation8 + $0x8f8] sm:$0xff]
        %v1256 = vld [vmem:[#allocation8 + $0x900] sm:$0xff]
        %v1257 = vld [vmem:[#allocation8 + $0x908] sm:$0xff]
        %v1258 = vld [vmem:[#allocation8 + $0x910] sm:$0xff]
        %v1259 = vld [vmem:[#allocation8 + $0x918] sm:$0xff]
        %v1260 = vld [vmem:[#allocation8 + $0x920] sm:$0xff]
        %v1261 = vld [vmem:[#allocation8 + $0x928] sm:$0xff]
        %v1262 = vld [vmem:[#allocation8 + $0x930] sm:$0xff]
        %v1263 = vld [vmem:[#allocation8 + $0x938] sm:$0xff]
        %v1264 = vld [vmem:[#allocation8 + $0x940] sm:$0xff]
        %v1265 = vld [vmem:[#allocation8 + $0x948] sm:$0xff]
        %v1266 = vld [vmem:[#allocation8 + $0x950] sm:$0xff]
        %v1267 = vld [vmem:[#allocation8 + $0x958] sm:$0xff]
        %v1268 = vld [vmem:[#allocation8 + $0x960] sm:$0xff]
        %v1269 = vld [vmem:[#allocation8 + $0x968] sm:$0xff]
        %v1270 = vld [vmem:[#allocation8 + $0x970] sm:$0xff]
        %v1271 = vld [vmem:[#allocation8 + $0x978] sm:$0xff]
        %v1272 = vld [vmem:[#allocation8 + $0x980] sm:$0xff]
        %v1273 = vld [vmem:[#allocation8 + $0x988] sm:$0xff]
        %v1274 = vld [vmem:[#allocation8 + $0x990] sm:$0xff]
        %v1275 = vld [vmem:[#allocation8 + $0x998] sm:$0xff]
        %v1276 = vld [vmem:[#allocation8 + $0x9a0] sm:$0xff]
        %v1277 = vld [vmem:[#allocation8 + $0x9a8] sm:$0xff]
        %v1278 = vld [vmem:[#allocation8 + $0x9b0] sm:$0xff]
        %v1279 = vld [vmem:[#allocation8 + $0x9b8] sm:$0xff]
        %v1280 = vld [vmem:[#allocation8 + $0x9c0] sm:$0xff]
        %v1281 = vld [vmem:[#allocation8 + $0x9c8] sm:$0xff]
        %v1282 = vld [vmem:[#allocation8 + $0x9d0] sm:$0xff]
        %v1283 = vld [vmem:[#allocation8 + $0x9d8] sm:$0xff]
        %v1284 = vld [vmem:[#allocation8 + $0x9e0] sm:$0xff]
        %v1285 = vld [vmem:[#allocation8 + $0x9e8] sm:$0xff]
        %v1286 = vld [vmem:[#allocation8 + $0x9f0] sm:$0xff]
        %v1287 = vld [vmem:[#allocation8 + $0x9f8] sm:$0xff]
        %v1288 = vld [vmem:[#allocation8 + $0xa00] sm:$0xff]
        %v1289 = vld [vmem:[#allocation8 + $0xa08] sm:$0xff]
        %v1290 = vld [vmem:[#allocation8 + $0xa10] sm:$0xff]
        %v1291 = vld [vmem:[#allocation8 + $0xa18] sm:$0xff]
        %v1292 = vld [vmem:[#allocation8 + $0xa20] sm:$0xff]
        %v1293 = vld [vmem:[#allocation8 + $0xa28] sm:$0xff]
        %v1294 = vld [vmem:[#allocation8 + $0xa30] sm:$0xff]
        %v1295 = vld [vmem:[#allocation8 + $0xa38] sm:$0xff]
        %v1296 = vld [vmem:[#allocation8 + $0xa40] sm:$0xff]
        %v1297 = vld [vmem:[#allocation8 + $0xa48] sm:$0xff]
        %v1298 = vld [vmem:[#allocation8 + $0xa50] sm:$0xff]
        %v1299 = vld [vmem:[#allocation8 + $0xa58] sm:$0xff]
        %v1300 = vld [vmem:[#allocation8 + $0xa60] sm:$0xff]
        %v1301 = vld [vmem:[#allocation8 + $0xa68] sm:$0xff]
        %v1302 = vld [vmem:[#allocation8 + $0xa70] sm:$0xff]
        %v1303 = vld [vmem:[#allocation8 + $0xa78] sm:$0xff]
        %v1304 = vld [vmem:[#allocation8 + $0xa80] sm:$0xff]
        %v1305 = vld [vmem:[#allocation8 + $0xa88] sm:$0xff]
        %v1306 = vld [vmem:[#allocation8 + $0xa90] sm:$0xff]
        %v1307 = vld [vmem:[#allocation8 + $0xa98] sm:$0xff]
        %v1308 = vld [vmem:[#allocation8 + $0xaa0] sm:$0xff]
        %v1309 = vld [vmem:[#allocation8 + $0xaa8] sm:$0xff]
        %v1310 = vld [vmem:[#allocation8 + $0xab0] sm:$0xff]
        %v1311 = vld [vmem:[#allocation8 + $0xab8] sm:$0xff]
        %v1312 = vld [vmem:[#allocation8 + $0xac0] sm:$0xff]
        %v1313 = vld [vmem:[#allocation8 + $0xac8] sm:$0xff]
        %v1314 = vld [vmem:[#allocation8 + $0xad0] sm:$0xff]
        %v1315 = vld [vmem:[#allocation8 + $0xad8] sm:$0xff]
        %v1316 = vld [vmem:[#allocation8 + $0xae0] sm:$0xff]
        %v1317 = vld [vmem:[#allocation8 + $0xae8] sm:$0xff]
        %v1318 = vld [vmem:[#allocation8 + $0xaf0] sm:$0xff]
        %v1319 = vld [vmem:[#allocation8 + $0xaf8] sm:$0xff]
        %v1320 = vld [vmem:[#allocation8 + $0xb00] sm:$0xff]
        %v1321 = vld [vmem:[#allocation8 + $0xb08] sm:$0xff]
        %v1322 = vld [vmem:[#allocation8 + $0xb10] sm:$0xff]
        %v1323 = vld [vmem:[#allocation8 + $0xb18] sm:$0xff]
        %v1324 = vld [vmem:[#allocation8 + $0xb20] sm:$0xff]
        %v1325 = vld [vmem:[#allocation8 + $0xb28] sm:$0xff]
        %v1326 = vld [vmem:[#allocation8 + $0xb30] sm:$0xff]
        %v1327 = vld [vmem:[#allocation8 + $0xb38] sm:$0xff]
        %v1328 = vld [vmem:[#allocation8 + $0xb40] sm:$0xff]
        %v1329 = vld [vmem:[#allocation8 + $0xb48] sm:$0xff]
        %v1330 = vld [vmem:[#allocation8 + $0xb50] sm:$0xff]
        %v1331 = vld [vmem:[#allocation8 + $0xb58] sm:$0xff]
        %v1332 = vld [vmem:[#allocation8 + $0xb60] sm:$0xff]
        %v1333 = vld [vmem:[#allocation8 + $0xb68] sm:$0xff]
        %v1334 = vld [vmem:[#allocation8 + $0xb70] sm:$0xff]
        %v1335 = vld [vmem:[#allocation8 + $0xb78] sm:$0xff]
        %v1336 = vld [vmem:[#allocation8 + $0xb80] sm:$0xff]
        %v1337 = vld [vmem:[#allocation8 + $0xb88] sm:$0xff]
        %v1338 = vld [vmem:[#allocation8 + $0xb90] sm:$0xff]
        %v1339 = vld [vmem:[#allocation8 + $0xb98] sm:$0xff]
        %v1340 = vld [vmem:[#allocation8 + $0xba0] sm:$0xff]
        %v1341 = vld [vmem:[#allocation8 + $0xba8] sm:$0xff]
        %v1342 = vld [vmem:[#allocation8 + $0xbb0] sm:$0xff]
        %v1343 = vld [vmem:[#allocation8 + $0xbb8] sm:$0xff]
        %v1344 = vld [vmem:[#allocation8 + $0xbc0] sm:$0xff]
        %v1345 = vld [vmem:[#allocation8 + $0xbc8] sm:$0xff]
        %v1346 = vld [vmem:[#allocation8 + $0xbd0] sm:$0xff]
        %v1347 = vld [vmem:[#allocation8 + $0xbd8] sm:$0xff]
        %v1348 = vld [vmem:[#allocation8 + $0xbe0] sm:$0xff]
        %v1349 = vld [vmem:[#allocation8 + $0xbe8] sm:$0xff]
        %v1350 = vld [vmem:[#allocation8 + $0xbf0] sm:$0xff]
        %v1351 = vld [vmem:[#allocation8 + $0xbf8] sm:$0xff]
        %v1352 = vld [vmem:[#allocation8 + $0xc00] sm:$0xff]
        %v1353 = vld [vmem:[#allocation8 + $0xc08] sm:$0xff]
        %v1354 = vld [vmem:[#allocation8 + $0xc10] sm:$0xff]
        %v1355 = vld [vmem:[#allocation8 + $0xc18] sm:$0xff]
        %v1356 = vld [vmem:[#allocation8 + $0xc20] sm:$0xff]
        %v1357 = vld [vmem:[#allocation8 + $0xc28] sm:$0xff]
        %v1358 = vld [vmem:[#allocation8 + $0xc30] sm:$0xff]
        %v1359 = vld [vmem:[#allocation8 + $0xc38] sm:$0xff]
        %v1360 = vld [vmem:[#allocation8 + $0xc40] sm:$0xff]
        %v1361 = vld [vmem:[#allocation8 + $0xc48] sm:$0xff]
        %v1362 = vld [vmem:[#allocation8 + $0xc50] sm:$0xff]
        %v1363 = vld [vmem:[#allocation8 + $0xc58] sm:$0xff]
        %v1364 = vld [vmem:[#allocation8 + $0xc60] sm:$0xff]
        %v1365 = vld [vmem:[#allocation8 + $0xc68] sm:$0xff]
        %v1366 = vld [vmem:[#allocation8 + $0xc70] sm:$0xff]
        %v1367 = vld [vmem:[#allocation8 + $0xc78] sm:$0xff]
        %v1368 = vld [vmem:[#allocation8 + $0xc80] sm:$0xff]
        %v1369 = vld [vmem:[#allocation8 + $0xc88] sm:$0xff]
        %v1370 = vld [vmem:[#allocation8 + $0xc90] sm:$0xff]
        %v1371 = vld [vmem:[#allocation8 + $0xc98] sm:$0xff]
        %v1372 = vld [vmem:[#allocation8 + $0xca0] sm:$0xff]
        %v1373 = vld [vmem:[#allocation8 + $0xca8] sm:$0xff]
        %v1374 = vld [vmem:[#allocation8 + $0xcb0] sm:$0xff]
        %v1375 = vld [vmem:[#allocation8 + $0xcb8] sm:$0xff]
        %v1376 = vld [vmem:[#allocation8 + $0xcc0] sm:$0xff]
        %v1377 = vld [vmem:[#allocation8 + $0xcc8] sm:$0xff]
        %v1378 = vld [vmem:[#allocation8 + $0xcd0] sm:$0xff]
        %v1379 = vld [vmem:[#allocation8 + $0xcd8] sm:$0xff]
        %v1380 = vld [vmem:[#allocation8 + $0xce0] sm:$0xff]
        %v1381 = vld [vmem:[#allocation8 + $0xce8] sm:$0xff]
        %v1382 = vld [vmem:[#allocation8 + $0xcf0] sm:$0xff]
        %v1383 = vld [vmem:[#allocation8 + $0xcf8] sm:$0xff]
        %v1384 = vld [vmem:[#allocation8 + $0xd00] sm:$0xff]
        %v1385 = vld [vmem:[#allocation8 + $0xd08] sm:$0xff]
        %v1386 = vld [vmem:[#allocation8 + $0xd10] sm:$0xff]
        %v1387 = vld [vmem:[#allocation8 + $0xd18] sm:$0xff]
        %v1388 = vld [vmem:[#allocation8 + $0xd20] sm:$0xff]
        %v1389 = vld [vmem:[#allocation8 + $0xd28] sm:$0xff]
        %v1390 = vld [vmem:[#allocation8 + $0xd30] sm:$0xff]
        %v1391 = vld [vmem:[#allocation8 + $0xd38] sm:$0xff]
        %v1392 = vld [vmem:[#allocation8 + $0xd40] sm:$0xff]
        %v1393 = vld [vmem:[#allocation8 + $0xd48] sm:$0xff]
        %v1394 = vld [vmem:[#allocation8 + $0xd50] sm:$0xff]
        %v1395 = vld [vmem:[#allocation8 + $0xd58] sm:$0xff]
        %v1396 = vld [vmem:[#allocation8 + $0xd60] sm:$0xff]
        %v1397 = vld [vmem:[#allocation8 + $0xd68] sm:$0xff]
        %v1398 = vld [vmem:[#allocation8 + $0xd70] sm:$0xff]
        %v1399 = vld [vmem:[#allocation8 + $0xd78] sm:$0xff]
        %v1400 = vld [vmem:[#allocation8 + $0xd80] sm:$0xff]
        %v1401 = vld [vmem:[#allocation8 + $0xd88] sm:$0xff]
        %v1402 = vld [vmem:[#allocation8 + $0xd90] sm:$0xff]
        %v1403 = vld [vmem:[#allocation8 + $0xd98] sm:$0xff]
        %v1404 = vld [vmem:[#allocation8 + $0xda0] sm:$0xff]
        %v1405 = vld [vmem:[#allocation8 + $0xda8] sm:$0xff]
        %v1406 = vld [vmem:[#allocation8 + $0xdb0] sm:$0xff]
        %v1407 = vld [vmem:[#allocation8 + $0xdb8] sm:$0xff]
        %v1408 = vld [vmem:[#allocation8 + $0xdc0] sm:$0xff]
        %v1409 = vld [vmem:[#allocation8 + $0xdc8] sm:$0xff]
        %v1410 = vld [vmem:[#allocation8 + $0xdd0] sm:$0xff]
        %v1411 = vld [vmem:[#allocation8 + $0xdd8] sm:$0xff]
        %v1412 = vld [vmem:[#allocation8 + $0xde0] sm:$0xff]
        %v1413 = vld [vmem:[#allocation8 + $0xde8] sm:$0xff]
        %v1414 = vld [vmem:[#allocation8 + $0xdf0] sm:$0xff]
        %v1415 = vld [vmem:[#allocation8 + $0xdf8] sm:$0xff]
        %v1416 = vld [vmem:[#allocation8 + $0xe00] sm:$0xff]
        %v1417 = vld [vmem:[#allocation8 + $0xe08] sm:$0xff]
        %v1418 = vld [vmem:[#allocation8 + $0xe10] sm:$0xff]
        %v1419 = vld [vmem:[#allocation8 + $0xe18] sm:$0xff]
        %v1420 = vld [vmem:[#allocation8 + $0xe20] sm:$0xff]
        %v1421 = vld [vmem:[#allocation8 + $0xe28] sm:$0xff]
        %v1422 = vld [vmem:[#allocation8 + $0xe30] sm:$0xff]
        %v1423 = vld [vmem:[#allocation8 + $0xe38] sm:$0xff]
        %v1424 = vld [vmem:[#allocation8 + $0xe40] sm:$0xff]
        %v1425 = vld [vmem:[#allocation8 + $0xe48] sm:$0xff]
        %v1426 = vld [vmem:[#allocation8 + $0xe50] sm:$0xff]
        %v1427 = vld [vmem:[#allocation8 + $0xe58] sm:$0xff]
        %v1428 = vld [vmem:[#allocation8 + $0xe60] sm:$0xff]
        %v1429 = vld [vmem:[#allocation8 + $0xe68] sm:$0xff]
        %v1430 = vld [vmem:[#allocation8 + $0xe70] sm:$0xff]
        %v1431 = vld [vmem:[#allocation8 + $0xe78] sm:$0xff]
        %v1432 = vld [vmem:[#allocation8 + $0xe80] sm:$0xff]
        %v1433 = vld [vmem:[#allocation8 + $0xe88] sm:$0xff]
        %v1434 = vld [vmem:[#allocation8 + $0xe90] sm:$0xff]
        %v1435 = vld [vmem:[#allocation8 + $0xe98] sm:$0xff]
        %v1436 = vld [vmem:[#allocation8 + $0xea0] sm:$0xff]
        %v1437 = vld [vmem:[#allocation8 + $0xea8] sm:$0xff]
        %v1438 = vld [vmem:[#allocation8 + $0xeb0] sm:$0xff]
        %v1439 = vld [vmem:[#allocation8 + $0xeb8] sm:$0xff]
        %v1440 = vld [vmem:[#allocation8 + $0xec0] sm:$0xff]
        %v1441 = vld [vmem:[#allocation8 + $0xec8] sm:$0xff]
        %v1442 = vld [vmem:[#allocation8 + $0xed0] sm:$0xff]
        %v1443 = vld [vmem:[#allocation8 + $0xed8] sm:$0xff]
        %v1444 = vld [vmem:[#allocation8 + $0xee0] sm:$0xff]
        %v1445 = vld [vmem:[#allocation8 + $0xee8] sm:$0xff]
        %v1446 = vld [vmem:[#allocation8 + $0xef0] sm:$0xff]
        %v1447 = vld [vmem:[#allocation8 + $0xef8] sm:$0xff]
        %v1448 = vld [vmem:[#allocation8 + $0xf00] sm:$0xff]
        %v1449 = vld [vmem:[#allocation8 + $0xf08] sm:$0xff]
        %v1450 = vld [vmem:[#allocation8 + $0xf10] sm:$0xff]
        %v1451 = vld [vmem:[#allocation8 + $0xf18] sm:$0xff]
        %v1452 = vld [vmem:[#allocation8 + $0xf20] sm:$0xff]
        %v1453 = vld [vmem:[#allocation8 + $0xf28] sm:$0xff]
        %v1454 = vld [vmem:[#allocation8 + $0xf30] sm:$0xff]
        %v1455 = vld [vmem:[#allocation8 + $0xf38] sm:$0xff]
        %v1456 = vld [vmem:[#allocation8 + $0xf40] sm:$0xff]
        %v1457 = vld [vmem:[#allocation8 + $0xf48] sm:$0xff]
        %v1458 = vld [vmem:[#allocation8 + $0xf50] sm:$0xff]
        %v1459 = vld [vmem:[#allocation8 + $0xf58] sm:$0xff]
        %v1460 = vld [vmem:[#allocation8 + $0xf60] sm:$0xff]
        %v1461 = vld [vmem:[#allocation8 + $0xf68] sm:$0xff]
        %v1462 = vld [vmem:[#allocation8 + $0xf70] sm:$0xff]
        %v1463 = vld [vmem:[#allocation8 + $0xf78] sm:$0xff]
        %v1464 = vld [vmem:[#allocation8 + $0xf80] sm:$0xff]
        %v1465 = vld [vmem:[#allocation8 + $0xf88] sm:$0xff]
        %v1466 = vld [vmem:[#allocation8 + $0xf90] sm:$0xff]
        %v1467 = vld [vmem:[#allocation8 + $0xf98] sm:$0xff]
        %v1468 = vld [vmem:[#allocation8 + $0xfa0] sm:$0xff]
        %v1469 = vld [vmem:[#allocation8 + $0xfa8] sm:$0xff]
        %v1470 = vld [vmem:[#allocation8 + $0xfb0] sm:$0xff]
        %v1471 = vld [vmem:[#allocation8 + $0xfb8] sm:$0xff]
        %v1472 = vld [vmem:[#allocation8 + $0xfc0] sm:$0xff]
        %v1473 = vld [vmem:[#allocation8 + $0xfc8] sm:$0xff]
        %v1474 = vld [vmem:[#allocation8 + $0xfd0] sm:$0xff]
        %v1475 = vld [vmem:[#allocation8 + $0xfd8] sm:$0xff]
        %v1476 = vld [vmem:[#allocation8 + $0xfe0] sm:$0xff]
        %v1477 = vld [vmem:[#allocation8 + $0xfe8] sm:$0xff]
        %v1478 = vld [vmem:[#allocation8 + $0xff0] sm:$0xff]
        %v1479 = vld [vmem:[#allocation8 + $0xff8] sm:$0xff]
        %v1480 = vld [vmem:[#allocation10] sm:$0xf]
        %v1482 = vlaneseq
        %v1483 = vshrl.u32 %v1482, 7
        %v1484 = vsub.s32 0, %v1483
        %v1485 = vrot.slane %v1480, %v1484
        %v1486 = vlaneseq
        %v1487 = vshrl.u32 %v1486, 7
        %v1488 = vsub.s32 1, %v1487
        %v1489 = vrot.slane %v1480, %v1488
        %v1490 = vlaneseq
        %v1491 = vshrl.u32 %v1490, 7
        %v1492 = vsub.s32 2, %v1491
        %v1493 = vrot.slane %v1480, %v1492
        %v1494 = vlaneseq
        %v1495 = vshrl.u32 %v1494, 7
        %v1496 = vsub.s32 3, %v1495
        %v1497 = vrot.slane %v1480, %v1496
        %1502 = vmatprep.subr.mxu0 %v1029
        %1503 = vmatpush1.msra.mxu0 %v1028
        %1504 = vmatprep.subr.mxu0 %v1025
        %1505 = vmatpush1.msra.mxu0 %v1024
        %1506 = vmatprep.subr.mxu0 %v1021
        %1507 = vmatpush1.msra.mxu0 %v1020
        %1508 = vmatprep.subr.mxu0 %v1017
        %1509 = vmatpush1.msra.mxu0 %v1016
        %1510 = vmatprep.subr.mxu0 %v1013
        %1511 = vmatpush1.msra.mxu0 %v1012
        %1512 = vmatprep.subr.mxu0 %v1009
        %1513 = vmatpush1.msra.mxu0 %v1008
        %1514 = vmatprep.subr.mxu0 %v1005
        %1515 = vmatpush1.msra.mxu0 %v1004
        %1516 = vmatprep.subr.mxu0 %v1001
        %1517 = vmatpush1.msra.mxu0 %v1000
        %1518 = vmatprep.subr.mxu0 %v997
        %1519 = vmatpush1.msra.mxu0 %v996
        %1520 = vmatprep.subr.mxu0 %v993
        %1521 = vmatpush1.msra.mxu0 %v992
        %1522 = vmatprep.subr.mxu0 %v989
        %1523 = vmatpush1.msra.mxu0 %v988
        %1524 = vmatprep.subr.mxu0 %v985
        %1525 = vmatpush1.msra.mxu0 %v984
        %1526 = vmatprep.subr.mxu0 %v981
        %1527 = vmatpush1.msra.mxu0 %v980
        %1528 = vmatprep.subr.mxu0 %v977
        %1529 = vmatpush1.msra.mxu0 %v976
        %1530 = vmatprep.subr.mxu0 %v973
        %1531 = vmatpush1.msra.mxu0 %v972
        %1532 = vmatprep.subr.mxu0 %v969
        %1533 = vmatpush1.msra.mxu0 %v968
        %1534 = vmatprep.subr.mxu0 %v1093
        %1535 = vmatpush2.msra.mxu0 %v1092
        %1536 = vmatprep.subr.mxu0 %v1089
        %1537 = vmatpush2.msra.mxu0 %v1088
        %1538 = vmatprep.subr.mxu0 %v1085
        %1539 = vmatpush2.msra.mxu0 %v1084
        %1540 = vmatprep.subr.mxu0 %v1081
        %1541 = vmatpush2.msra.mxu0 %v1080
        %1542 = vmatprep.subr.mxu0 %v1077
        %1543 = vmatpush2.msra.mxu0 %v1076
        %1544 = vmatprep.subr.mxu0 %v1073
        %1545 = vmatpush2.msra.mxu0 %v1072
        %1546 = vmatprep.subr.mxu0 %v1069
        %1547 = vmatpush2.msra.mxu0 %v1068
        %1548 = vmatprep.subr.mxu0 %v1065
        %1549 = vmatpush2.msra.mxu0 %v1064
        %1550 = vmatprep.subr.mxu0 %v1061
        %1551 = vmatpush2.msra.mxu0 %v1060
        %1552 = vmatprep.subr.mxu0 %v1057
        %1553 = vmatpush2.msra.mxu0 %v1056
        %1554 = vmatprep.subr.mxu0 %v1053
        %1555 = vmatpush2.msra.mxu0 %v1052
        %1556 = vmatprep.subr.mxu0 %v1049
        %1557 = vmatpush2.msra.mxu0 %v1048
        %1558 = vmatprep.subr.mxu0 %v1045
        %1559 = vmatpush2.msra.mxu0 %v1044
        %1560 = vmatprep.subr.mxu0 %v1041
        %1561 = vmatpush2.msra.mxu0 %v1040
        %1562 = vmatprep.subr.mxu0 %v1037
        %1563 = vmatpush2.msra.mxu0 %v1036
        %1564 = vmatprep.subr.mxu0 %v1033
        %1565 = vmatpush2.msra.mxu0 %v1032
        %1566 = vmatprep.mubr.f32.mxu0 %v961
        %1567 = vmatmul.mubr.f32.gmra.mxu0 %v960
        %v1568 = vpop.f32.mrf.mxu0
        %v1569 = vadd.f32 %v1485, %v1568
        %v1570 = vpop.f32.mrf.mxu0
        %v1571 = vadd.f32 %v1489, %v1570
        %1572 = vdwg.mxu0
        %1573 = vmatprep.subr.mxu0 %v1157
        %1574 = vmatpush1.msra.mxu0 %v1156
        %1575 = vmatprep.subr.mxu0 %v1153
        %1576 = vmatpush1.msra.mxu0 %v1152
        %1577 = vmatprep.subr.mxu0 %v1149
        %1578 = vmatpush1.msra.mxu0 %v1148
        %1579 = vmatprep.subr.mxu0 %v1145
        %1580 = vmatpush1.msra.mxu0 %v1144
        %1581 = vmatprep.subr.mxu0 %v1141
        %1582 = vmatpush1.msra.mxu0 %v1140
        %1583 = vmatprep.subr.mxu0 %v1137
        %1584 = vmatpush1.msra.mxu0 %v1136
        %1585 = vmatprep.subr.mxu0 %v1133
        %1586 = vmatpush1.msra.mxu0 %v1132
        %1587 = vmatprep.subr.mxu0 %v1129
        %1588 = vmatpush1.msra.mxu0 %v1128
        %1589 = vmatprep.subr.mxu0 %v1125
        %1590 = vmatpush1.msra.mxu0 %v1124
        %1591 = vmatprep.subr.mxu0 %v1121
        %1592 = vmatpush1.msra.mxu0 %v1120
        %1593 = vmatprep.subr.mxu0 %v1117
        %1594 = vmatpush1.msra.mxu0 %v1116
        %1595 = vmatprep.subr.mxu0 %v1113
        %1596 = vmatpush1.msra.mxu0 %v1112
        %1597 = vmatprep.subr.mxu0 %v1109
        %1598 = vmatpush1.msra.mxu0 %v1108
        %1599 = vmatprep.subr.mxu0 %v1105
        %1600 = vmatpush1.msra.mxu0 %v1104
        %1601 = vmatprep.subr.mxu0 %v1101
        %1602 = vmatpush1.msra.mxu0 %v1100
        %1603 = vmatprep.subr.mxu0 %v1097
        %1604 = vmatpush1.msra.mxu0 %v1096
        %1605 = vmatprep.subr.mxu0 %v1221
        %1606 = vmatpush2.msra.mxu0 %v1220
        %1607 = vmatprep.subr.mxu0 %v1217
        %1608 = vmatpush2.msra.mxu0 %v1216
        %1609 = vmatprep.subr.mxu0 %v1213
        %1610 = vmatpush2.msra.mxu0 %v1212
        %1611 = vmatprep.subr.mxu0 %v1209
        %1612 = vmatpush2.msra.mxu0 %v1208
        %1613 = vmatprep.subr.mxu0 %v1205
        %1614 = vmatpush2.msra.mxu0 %v1204
        %1615 = vmatprep.subr.mxu0 %v1201
        %1616 = vmatpush2.msra.mxu0 %v1200
        %1617 = vmatprep.subr.mxu0 %v1197
        %1618 = vmatpush2.msra.mxu0 %v1196
        %1619 = vmatprep.subr.mxu0 %v1193
        %1620 = vmatpush2.msra.mxu0 %v1192
        %1621 = vmatprep.subr.mxu0 %v1189
        %1622 = vmatpush2.msra.mxu0 %v1188
        %1623 = vmatprep.subr.mxu0 %v1185
        %1624 = vmatpush2.msra.mxu0 %v1184
        %1625 = vmatprep.subr.mxu0 %v1181
        %1626 = vmatpush2.msra.mxu0 %v1180
        %1627 = vmatprep.subr.mxu0 %v1177
        %1628 = vmatpush2.msra.mxu0 %v1176
        %1629 = vmatprep.subr.mxu0 %v1173
        %1630 = vmatpush2.msra.mxu0 %v1172
        %1631 = vmatprep.subr.mxu0 %v1169
        %1632 = vmatpush2.msra.mxu0 %v1168
        %1633 = vmatprep.subr.mxu0 %v1165
        %1634 = vmatpush2.msra.mxu0 %v1164
        %1635 = vmatprep.subr.mxu0 %v1161
        %1636 = vmatpush2.msra.mxu0 %v1160
        %1637 = vmatprep.mubr.f32.mxu0 %v963
        %1638 = vmatmul.mubr.f32.gmra.mxu0 %v962
        %v1639 = vpop.f32.mrf.mxu0
        %v1640 = vadd.f32 %v1569, %v1639
        %v1641 = vpop.f32.mrf.mxu0
        %v1642 = vadd.f32 %v1571, %v1641
        %1643 = vdwg.mxu0
        %1644 = vmatprep.subr.mxu0 %v1285
        %1645 = vmatpush1.msra.mxu0 %v1284
        %1646 = vmatprep.subr.mxu0 %v1281
        %1647 = vmatpush1.msra.mxu0 %v1280
        %1648 = vmatprep.subr.mxu0 %v1277
        %1649 = vmatpush1.msra.mxu0 %v1276
        %1650 = vmatprep.subr.mxu0 %v1273
        %1651 = vmatpush1.msra.mxu0 %v1272
        %1652 = vmatprep.subr.mxu0 %v1269
        %1653 = vmatpush1.msra.mxu0 %v1268
        %1654 = vmatprep.subr.mxu0 %v1265
        %1655 = vmatpush1.msra.mxu0 %v1264
        %1656 = vmatprep.subr.mxu0 %v1261
        %1657 = vmatpush1.msra.mxu0 %v1260
        %1658 = vmatprep.subr.mxu0 %v1257
        %1659 = vmatpush1.msra.mxu0 %v1256
        %1660 = vmatprep.subr.mxu0 %v1253
        %1661 = vmatpush1.msra.mxu0 %v1252
        %1662 = vmatprep.subr.mxu0 %v1249
        %1663 = vmatpush1.msra.mxu0 %v1248
        %1664 = vmatprep.subr.mxu0 %v1245
        %1665 = vmatpush1.msra.mxu0 %v1244
        %1666 = vmatprep.subr.mxu0 %v1241
        %1667 = vmatpush1.msra.mxu0 %v1240
        %1668 = vmatprep.subr.mxu0 %v1237
        %1669 = vmatpush1.msra.mxu0 %v1236
        %1670 = vmatprep.subr.mxu0 %v1233
        %1671 = vmatpush1.msra.mxu0 %v1232
        %1672 = vmatprep.subr.mxu0 %v1229
        %1673 = vmatpush1.msra.mxu0 %v1228
        %1674 = vmatprep.subr.mxu0 %v1225
        %1675 = vmatpush1.msra.mxu0 %v1224
        %1676 = vmatprep.subr.mxu0 %v1349
        %1677 = vmatpush2.msra.mxu0 %v1348
        %1678 = vmatprep.subr.mxu0 %v1345
        %1679 = vmatpush2.msra.mxu0 %v1344
        %1680 = vmatprep.subr.mxu0 %v1341
        %1681 = vmatpush2.msra.mxu0 %v1340
        %1682 = vmatprep.subr.mxu0 %v1337
        %1683 = vmatpush2.msra.mxu0 %v1336
        %1684 = vmatprep.subr.mxu0 %v1333
        %1685 = vmatpush2.msra.mxu0 %v1332
        %1686 = vmatprep.subr.mxu0 %v1329
        %1687 = vmatpush2.msra.mxu0 %v1328
        %1688 = vmatprep.subr.mxu0 %v1325
        %1689 = vmatpush2.msra.mxu0 %v1324
        %1690 = vmatprep.subr.mxu0 %v1321
        %1691 = vmatpush2.msra.mxu0 %v1320
        %1692 = vmatprep.subr.mxu0 %v1317
        %1693 = vmatpush2.msra.mxu0 %v1316
        %1694 = vmatprep.subr.mxu0 %v1313
        %1695 = vmatpush2.msra.mxu0 %v1312
        %1696 = vmatprep.subr.mxu0 %v1309
        %1697 = vmatpush2.msra.mxu0 %v1308
        %1698 = vmatprep.subr.mxu0 %v1305
        %1699 = vmatpush2.msra.mxu0 %v1304
        %1700 = vmatprep.subr.mxu0 %v1301
        %1701 = vmatpush2.msra.mxu0 %v1300
        %1702 = vmatprep.subr.mxu0 %v1297
        %1703 = vmatpush2.msra.mxu0 %v1296
        %1704 = vmatprep.subr.mxu0 %v1293
        %1705 = vmatpush2.msra.mxu0 %v1292
        %1706 = vmatprep.subr.mxu0 %v1289
        %1707 = vmatpush2.msra.mxu0 %v1288
        %1708 = vmatprep.mubr.f32.mxu0 %v965
        %1709 = vmatmul.mubr.f32.gmra.mxu0 %v964
        %v1710 = vpop.f32.mrf.mxu0
        %v1711 = vadd.f32 %v1640, %v1710
        %v1712 = vpop.f32.mrf.mxu0
        %v1713 = vadd.f32 %v1642, %v1712
        %1714 = vdwg.mxu0
        %1715 = vmatprep.subr.mxu0 %v1413
        %1716 = vmatpush1.msra.mxu0 %v1412
        %1717 = vmatprep.subr.mxu0 %v1409
        %1718 = vmatpush1.msra.mxu0 %v1408
        %1719 = vmatprep.subr.mxu0 %v1405
        %1720 = vmatpush1.msra.mxu0 %v1404
        %1721 = vmatprep.subr.mxu0 %v1401
        %1722 = vmatpush1.msra.mxu0 %v1400
        %1723 = vmatprep.subr.mxu0 %v1397
        %1724 = vmatpush1.msra.mxu0 %v1396
        %1725 = vmatprep.subr.mxu0 %v1393
        %1726 = vmatpush1.msra.mxu0 %v1392
        %1727 = vmatprep.subr.mxu0 %v1389
        %1728 = vmatpush1.msra.mxu0 %v1388
        %1729 = vmatprep.subr.mxu0 %v1385
        %1730 = vmatpush1.msra.mxu0 %v1384
        %1731 = vmatprep.subr.mxu0 %v1381
        %1732 = vmatpush1.msra.mxu0 %v1380
        %1733 = vmatprep.subr.mxu0 %v1377
        %1734 = vmatpush1.msra.mxu0 %v1376
        %1735 = vmatprep.subr.mxu0 %v1373
        %1736 = vmatpush1.msra.mxu0 %v1372
        %1737 = vmatprep.subr.mxu0 %v1369
        %1738 = vmatpush1.msra.mxu0 %v1368
        %1739 = vmatprep.subr.mxu0 %v1365
        %1740 = vmatpush1.msra.mxu0 %v1364
        %1741 = vmatprep.subr.mxu0 %v1361
        %1742 = vmatpush1.msra.mxu0 %v1360
        %1743 = vmatprep.subr.mxu0 %v1357
        %1744 = vmatpush1.msra.mxu0 %v1356
        %1745 = vmatprep.subr.mxu0 %v1353
        %1746 = vmatpush1.msra.mxu0 %v1352
        %1747 = vmatprep.subr.mxu0 %v1477
        %1748 = vmatpush2.msra.mxu0 %v1476
        %1749 = vmatprep.subr.mxu0 %v1473
        %1750 = vmatpush2.msra.mxu0 %v1472
        %1751 = vmatprep.subr.mxu0 %v1469
        %1752 = vmatpush2.msra.mxu0 %v1468
        %1753 = vmatprep.subr.mxu0 %v1465
        %1754 = vmatpush2.msra.mxu0 %v1464
        %1755 = vmatprep.subr.mxu0 %v1461
        %1756 = vmatpush2.msra.mxu0 %v1460
        %1757 = vmatprep.subr.mxu0 %v1457
        %1758 = vmatpush2.msra.mxu0 %v1456
        %1759 = vmatprep.subr.mxu0 %v1453
        %1760 = vmatpush2.msra.mxu0 %v1452
        %1761 = vmatprep.subr.mxu0 %v1449
        %1762 = vmatpush2.msra.mxu0 %v1448
        %1763 = vmatprep.subr.mxu0 %v1445
        %1764 = vmatpush2.msra.mxu0 %v1444
        %1765 = vmatprep.subr.mxu0 %v1441
        %1766 = vmatpush2.msra.mxu0 %v1440
        %1767 = vmatprep.subr.mxu0 %v1437
        %1768 = vmatpush2.msra.mxu0 %v1436
        %1769 = vmatprep.subr.mxu0 %v1433
        %1770 = vmatpush2.msra.mxu0 %v1432
        %1771 = vmatprep.subr.mxu0 %v1429
        %1772 = vmatpush2.msra.mxu0 %v1428
        %1773 = vmatprep.subr.mxu0 %v1425
        %1774 = vmatpush2.msra.mxu0 %v1424
        %1775 = vmatprep.subr.mxu0 %v1421
        %1776 = vmatpush2.msra.mxu0 %v1420
        %1777 = vmatprep.subr.mxu0 %v1417
        %1778 = vmatpush2.msra.mxu0 %v1416
        %1779 = vmatprep.mubr.f32.mxu0 %v967
        %1780 = vmatmul.mubr.f32.gmra.mxu0 %v966
        %v1781 = vpop.f32.mrf.mxu0
        %v1782 = vadd.f32 %v1711, %v1781
        %v1783 = vpop.f32.mrf.mxu0
        %v1784 = vadd.f32 %v1713, %v1783
        %1785 = vdwg.mxu0
        %1786 = vmatprep.subr.mxu0 %v1031
        %1787 = vmatpush1.msra.mxu0 %v1030
        %1788 = vmatprep.subr.mxu0 %v1027
        %1789 = vmatpush1.msra.mxu0 %v1026
        %1790 = vmatprep.subr.mxu0 %v1023
        %1791 = vmatpush1.msra.mxu0 %v1022
        %1792 = vmatprep.subr.mxu0 %v1019
        %1793 = vmatpush1.msra.mxu0 %v1018
        %1794 = vmatprep.subr.mxu0 %v1015
        %1795 = vmatpush1.msra.mxu0 %v1014
        %1796 = vmatprep.subr.mxu0 %v1011
        %1797 = vmatpush1.msra.mxu0 %v1010
        %1798 = vmatprep.subr.mxu0 %v1007
        %1799 = vmatpush1.msra.mxu0 %v1006
        %1800 = vmatprep.subr.mxu0 %v1003
        %1801 = vmatpush1.msra.mxu0 %v1002
        %1802 = vmatprep.subr.mxu0 %v999
        %1803 = vmatpush1.msra.mxu0 %v998
        %1804 = vmatprep.subr.mxu0 %v995
        %1805 = vmatpush1.msra.mxu0 %v994
        %1806 = vmatprep.subr.mxu0 %v991
        %1807 = vmatpush1.msra.mxu0 %v990
        %1808 = vmatprep.subr.mxu0 %v987
        %1809 = vmatpush1.msra.mxu0 %v986
        %1810 = vmatprep.subr.mxu0 %v983
        %1811 = vmatpush1.msra.mxu0 %v982
        %1812 = vmatprep.subr.mxu0 %v979
        %1813 = vmatpush1.msra.mxu0 %v978
        %1814 = vmatprep.subr.mxu0 %v975
        %1815 = vmatpush1.msra.mxu0 %v974
        %1816 = vmatprep.subr.mxu0 %v971
        %1817 = vmatpush1.msra.mxu0 %v970
        %1818 = vmatprep.subr.mxu0 %v1095
        %1819 = vmatpush2.msra.mxu0 %v1094
        %1820 = vmatprep.subr.mxu0 %v1091
        %1821 = vmatpush2.msra.mxu0 %v1090
        %1822 = vmatprep.subr.mxu0 %v1087
        %1823 = vmatpush2.msra.mxu0 %v1086
        %1824 = vmatprep.subr.mxu0 %v1083
        %1825 = vmatpush2.msra.mxu0 %v1082
        %1826 = vmatprep.subr.mxu0 %v1079
        %1827 = vmatpush2.msra.mxu0 %v1078
        %1828 = vmatprep.subr.mxu0 %v1075
        %1829 = vmatpush2.msra.mxu0 %v1074
        %1830 = vmatprep.subr.mxu0 %v1071
        %1831 = vmatpush2.msra.mxu0 %v1070
        %1832 = vmatprep.subr.mxu0 %v1067
        %1833 = vmatpush2.msra.mxu0 %v1066
        %1834 = vmatprep.subr.mxu0 %v1063
        %1835 = vmatpush2.msra.mxu0 %v1062
        %1836 = vmatprep.subr.mxu0 %v1059
        %1837 = vmatpush2.msra.mxu0 %v1058
        %1838 = vmatprep.subr.mxu0 %v1055
        %1839 = vmatpush2.msra.mxu0 %v1054
        %1840 = vmatprep.subr.mxu0 %v1051
        %1841 = vmatpush2.msra.mxu0 %v1050
        %1842 = vmatprep.subr.mxu0 %v1047
        %1843 = vmatpush2.msra.mxu0 %v1046
        %1844 = vmatprep.subr.mxu0 %v1043
        %1845 = vmatpush2.msra.mxu0 %v1042
        %1846 = vmatprep.subr.mxu0 %v1039
        %1847 = vmatpush2.msra.mxu0 %v1038
        %1848 = vmatprep.subr.mxu0 %v1035
        %1849 = vmatpush2.msra.mxu0 %v1034
        %1850 = vmatprep.mubr.f32.mxu0 %v961
        %1851 = vmatmul.mubr.f32.gmra.mxu0 %v960
        %v1852 = vpop.f32.mrf.mxu0
        %v1853 = vadd.f32 %v1493, %v1852
        %v1854 = vpop.f32.mrf.mxu0
        %v1855 = vadd.f32 %v1497, %v1854
        %1856 = vdwg.mxu0
        %1857 = vmatprep.subr.mxu0 %v1159
        %1858 = vmatpush1.msra.mxu0 %v1158
        %1859 = vmatprep.subr.mxu0 %v1155
        %1860 = vmatpush1.msra.mxu0 %v1154
        %1861 = vmatprep.subr.mxu0 %v1151
        %1862 = vmatpush1.msra.mxu0 %v1150
        %1863 = vmatprep.subr.mxu0 %v1147
        %1864 = vmatpush1.msra.mxu0 %v1146
        %1865 = vmatprep.subr.mxu0 %v1143
        %1866 = vmatpush1.msra.mxu0 %v1142
        %1867 = vmatprep.subr.mxu0 %v1139
        %1868 = vmatpush1.msra.mxu0 %v1138
        %1869 = vmatprep.subr.mxu0 %v1135
        %1870 = vmatpush1.msra.mxu0 %v1134
        %1871 = vmatprep.subr.mxu0 %v1131
        %1872 = vmatpush1.msra.mxu0 %v1130
        %1873 = vmatprep.subr.mxu0 %v1127
        %1874 = vmatpush1.msra.mxu0 %v1126
        %1875 = vmatprep.subr.mxu0 %v1123
        %1876 = vmatpush1.msra.mxu0 %v1122
        %1877 = vmatprep.subr.mxu0 %v1119
        %1878 = vmatpush1.msra.mxu0 %v1118
        %1879 = vmatprep.subr.mxu0 %v1115
        %1880 = vmatpush1.msra.mxu0 %v1114
        %1881 = vmatprep.subr.mxu0 %v1111
        %1882 = vmatpush1.msra.mxu0 %v1110
        %1883 = vmatprep.subr.mxu0 %v1107
        %1884 = vmatpush1.msra.mxu0 %v1106
        %1885 = vmatprep.subr.mxu0 %v1103
        %1886 = vmatpush1.msra.mxu0 %v1102
        %1887 = vmatprep.subr.mxu0 %v1099
        %1888 = vmatpush1.msra.mxu0 %v1098
        %1889 = vmatprep.subr.mxu0 %v1223
        %1890 = vmatpush2.msra.mxu0 %v1222
        %1891 = vmatprep.subr.mxu0 %v1219
        %1892 = vmatpush2.msra.mxu0 %v1218
        %1893 = vmatprep.subr.mxu0 %v1215
        %1894 = vmatpush2.msra.mxu0 %v1214
        %1895 = vmatprep.subr.mxu0 %v1211
        %1896 = vmatpush2.msra.mxu0 %v1210
        %1897 = vmatprep.subr.mxu0 %v1207
        %1898 = vmatpush2.msra.mxu0 %v1206
        %1899 = vmatprep.subr.mxu0 %v1203
        %1900 = vmatpush2.msra.mxu0 %v1202
        %1901 = vmatprep.subr.mxu0 %v1199
        %1902 = vmatpush2.msra.mxu0 %v1198
        %1903 = vmatprep.subr.mxu0 %v1195
        %1904 = vmatpush2.msra.mxu0 %v1194
        %1905 = vmatprep.subr.mxu0 %v1191
        %1906 = vmatpush2.msra.mxu0 %v1190
        %1907 = vmatprep.subr.mxu0 %v1187
        %1908 = vmatpush2.msra.mxu0 %v1186
        %1909 = vmatprep.subr.mxu0 %v1183
        %1910 = vmatpush2.msra.mxu0 %v1182
        %1911 = vmatprep.subr.mxu0 %v1179
        %1912 = vmatpush2.msra.mxu0 %v1178
        %1913 = vmatprep.subr.mxu0 %v1175
        %1914 = vmatpush2.msra.mxu0 %v1174
        %1915 = vmatprep.subr.mxu0 %v1171
        %1916 = vmatpush2.msra.mxu0 %v1170
        %1917 = vmatprep.subr.mxu0 %v1167
        %1918 = vmatpush2.msra.mxu0 %v1166
        %1919 = vmatprep.subr.mxu0 %v1163
        %1920 = vmatpush2.msra.mxu0 %v1162
        %1921 = vmatprep.mubr.f32.mxu0 %v963
        %1922 = vmatmul.mubr.f32.gmra.mxu0 %v962
        %v1923 = vpop.f32.mrf.mxu0
        %v1924 = vadd.f32 %v1853, %v1923
        %v1925 = vpop.f32.mrf.mxu0
        %v1926 = vadd.f32 %v1855, %v1925
        %1927 = vdwg.mxu0
        %1928 = vmatprep.subr.mxu0 %v1287
        %1929 = vmatpush1.msra.mxu0 %v1286
        %1930 = vmatprep.subr.mxu0 %v1283
        %1931 = vmatpush1.msra.mxu0 %v1282
        %1932 = vmatprep.subr.mxu0 %v1279
        %1933 = vmatpush1.msra.mxu0 %v1278
        %1934 = vmatprep.subr.mxu0 %v1275
        %1935 = vmatpush1.msra.mxu0 %v1274
        %1936 = vmatprep.subr.mxu0 %v1271
        %1937 = vmatpush1.msra.mxu0 %v1270
        %1938 = vmatprep.subr.mxu0 %v1267
        %1939 = vmatpush1.msra.mxu0 %v1266
        %1940 = vmatprep.subr.mxu0 %v1263
        %1941 = vmatpush1.msra.mxu0 %v1262
        %1942 = vmatprep.subr.mxu0 %v1259
        %1943 = vmatpush1.msra.mxu0 %v1258
        %1944 = vmatprep.subr.mxu0 %v1255
        %1945 = vmatpush1.msra.mxu0 %v1254
        %1946 = vmatprep.subr.mxu0 %v1251
        %1947 = vmatpush1.msra.mxu0 %v1250
        %1948 = vmatprep.subr.mxu0 %v1247
        %1949 = vmatpush1.msra.mxu0 %v1246
        %1950 = vmatprep.subr.mxu0 %v1243
        %1951 = vmatpush1.msra.mxu0 %v1242
        %1952 = vmatprep.subr.mxu0 %v1239
        %1953 = vmatpush1.msra.mxu0 %v1238
        %1954 = vmatprep.subr.mxu0 %v1235
        %1955 = vmatpush1.msra.mxu0 %v1234
        %1956 = vmatprep.subr.mxu0 %v1231
        %1957 = vmatpush1.msra.mxu0 %v1230
        %1958 = vmatprep.subr.mxu0 %v1227
        %1959 = vmatpush1.msra.mxu0 %v1226
        %1960 = vmatprep.subr.mxu0 %v1351
        %1961 = vmatpush2.msra.mxu0 %v1350
        %1962 = vmatprep.subr.mxu0 %v1347
        %1963 = vmatpush2.msra.mxu0 %v1346
        %1964 = vmatprep.subr.mxu0 %v1343
        %1965 = vmatpush2.msra.mxu0 %v1342
        %1966 = vmatprep.subr.mxu0 %v1339
        %1967 = vmatpush2.msra.mxu0 %v1338
        %1968 = vmatprep.subr.mxu0 %v1335
        %1969 = vmatpush2.msra.mxu0 %v1334
        %1970 = vmatprep.subr.mxu0 %v1331
        %1971 = vmatpush2.msra.mxu0 %v1330
        %1972 = vmatprep.subr.mxu0 %v1327
        %1973 = vmatpush2.msra.mxu0 %v1326
        %1974 = vmatprep.subr.mxu0 %v1323
        %1975 = vmatpush2.msra.mxu0 %v1322
        %1976 = vmatprep.subr.mxu0 %v1319
        %1977 = vmatpush2.msra.mxu0 %v1318
        %1978 = vmatprep.subr.mxu0 %v1315
        %1979 = vmatpush2.msra.mxu0 %v1314
        %1980 = vmatprep.subr.mxu0 %v1311
        %1981 = vmatpush2.msra.mxu0 %v1310
        %1982 = vmatprep.subr.mxu0 %v1307
        %1983 = vmatpush2.msra.mxu0 %v1306
        %1984 = vmatprep.subr.mxu0 %v1303
        %1985 = vmatpush2.msra.mxu0 %v1302
        %1986 = vmatprep.subr.mxu0 %v1299
        %1987 = vmatpush2.msra.mxu0 %v1298
        %1988 = vmatprep.subr.mxu0 %v1295
        %1989 = vmatpush2.msra.mxu0 %v1294
        %1990 = vmatprep.subr.mxu0 %v1291
        %1991 = vmatpush2.msra.mxu0 %v1290
        %1992 = vmatprep.mubr.f32.mxu0 %v965
        %1993 = vmatmul.mubr.f32.gmra.mxu0 %v964
        %v1994 = vpop.f32.mrf.mxu0
        %v1995 = vadd.f32 %v1924, %v1994
        %v1996 = vpop.f32.mrf.mxu0
        %v1997 = vadd.f32 %v1926, %v1996
        %1998 = vdwg.mxu0
        %1999 = vmatprep.subr.mxu0 %v1415
        %2000 = vmatpush1.msra.mxu0 %v1414
        %2001 = vmatprep.subr.mxu0 %v1411
        %2002 = vmatpush1.msra.mxu0 %v1410
        %2003 = vmatprep.subr.mxu0 %v1407
        %2004 = vmatpush1.msra.mxu0 %v1406
        %2005 = vmatprep.subr.mxu0 %v1403
        %2006 = vmatpush1.msra.mxu0 %v1402
        %2007 = vmatprep.subr.mxu0 %v1399
        %2008 = vmatpush1.msra.mxu0 %v1398
        %2009 = vmatprep.subr.mxu0 %v1395
        %2010 = vmatpush1.msra.mxu0 %v1394
        %2011 = vmatprep.subr.mxu0 %v1391
        %2012 = vmatpush1.msra.mxu0 %v1390
        %2013 = vmatprep.subr.mxu0 %v1387
        %2014 = vmatpush1.msra.mxu0 %v1386
        %2015 = vmatprep.subr.mxu0 %v1383
        %2016 = vmatpush1.msra.mxu0 %v1382
        %2017 = vmatprep.subr.mxu0 %v1379
        %2018 = vmatpush1.msra.mxu0 %v1378
        %2019 = vmatprep.subr.mxu0 %v1375
        %2020 = vmatpush1.msra.mxu0 %v1374
        %2021 = vmatprep.subr.mxu0 %v1371
        %2022 = vmatpush1.msra.mxu0 %v1370
        %2023 = vmatprep.subr.mxu0 %v1367
        %2024 = vmatpush1.msra.mxu0 %v1366
        %2025 = vmatprep.subr.mxu0 %v1363
        %2026 = vmatpush1.msra.mxu0 %v1362
        %2027 = vmatprep.subr.mxu0 %v1359
        %2028 = vmatpush1.msra.mxu0 %v1358
        %2029 = vmatprep.subr.mxu0 %v1355
        %2030 = vmatpush1.msra.mxu0 %v1354
        %2031 = vmatprep.subr.mxu0 %v1479
        %2032 = vmatpush2.msra.mxu0 %v1478
        %2033 = vmatprep.subr.mxu0 %v1475
        %2034 = vmatpush2.msra.mxu0 %v1474
        %2035 = vmatprep.subr.mxu0 %v1471
        %2036 = vmatpush2.msra.mxu0 %v1470
        %2037 = vmatprep.subr.mxu0 %v1467
        %2038 = vmatpush2.msra.mxu0 %v1466
        %2039 = vmatprep.subr.mxu0 %v1463
        %2040 = vmatpush2.msra.mxu0 %v1462
        %2041 = vmatprep.subr.mxu0 %v1459
        %2042 = vmatpush2.msra.mxu0 %v1458
        %2043 = vmatprep.subr.mxu0 %v1455
        %2044 = vmatpush2.msra.mxu0 %v1454
        %2045 = vmatprep.subr.mxu0 %v1451
        %2046 = vmatpush2.msra.mxu0 %v1450
        %2047 = vmatprep.subr.mxu0 %v1447
        %2048 = vmatpush2.msra.mxu0 %v1446
        %2049 = vmatprep.subr.mxu0 %v1443
        %2050 = vmatpush2.msra.mxu0 %v1442
        %2051 = vmatprep.subr.mxu0 %v1439
        %2052 = vmatpush2.msra.mxu0 %v1438
        %2053 = vmatprep.subr.mxu0 %v1435
        %2054 = vmatpush2.msra.mxu0 %v1434
        %2055 = vmatprep.subr.mxu0 %v1431
        %2056 = vmatpush2.msra.mxu0 %v1430
        %2057 = vmatprep.subr.mxu0 %v1427
        %2058 = vmatpush2.msra.mxu0 %v1426
        %2059 = vmatprep.subr.mxu0 %v1423
        %2060 = vmatpush2.msra.mxu0 %v1422
        %2061 = vmatprep.subr.mxu0 %v1419
        %2062 = vmatpush2.msra.mxu0 %v1418
        %2063 = vmatprep.mubr.f32.mxu0 %v967
        %2064 = vmatmul.mubr.f32.gmra.mxu0 %v966
        %v2065 = vpop.f32.mrf.mxu0
        %v2066 = vadd.f32 %v1995, %v2065
        %v2067 = vpop.f32.mrf.mxu0
        %v2068 = vadd.f32 %v1997, %v2067
        %2069 = vdwg.mxu0
        %v2070 = vmax.f32 %v1782, 0.0
        %v2071 = vmax.f32 %v1784, 0.0
        %v2072 = vmax.f32 %v2066, 0.0
        %v2073 = vmax.f32 %v2068, 0.0
        %v2074 = vld [vmem:[#allocation11] sm:$0xff]
        %v2075 = vld [vmem:[#allocation11 + $0x8] sm:$0xff]
        %v2076 = vld [vmem:[#allocation11 + $0x10] sm:$0xff]
        %v2077 = vld [vmem:[#allocation11 + $0x18] sm:$0xff]
        %v2078 = vld [vmem:[#allocation11 + $0x20] sm:$0xff]
        %v2079 = vld [vmem:[#allocation11 + $0x28] sm:$0xff]
        %v2080 = vld [vmem:[#allocation11 + $0x30] sm:$0xff]
        %v2081 = vld [vmem:[#allocation11 + $0x38] sm:$0xff]
        %v2082 = vld [vmem:[#allocation11 + $0x40] sm:$0xff]
        %v2083 = vld [vmem:[#allocation11 + $0x48] sm:$0xff]
        %v2084 = vld [vmem:[#allocation11 + $0x50] sm:$0xff]
        %v2085 = vld [vmem:[#allocation11 + $0x58] sm:$0xff]
        %v2086 = vld [vmem:[#allocation11 + $0x60] sm:$0xff]
        %v2087 = vld [vmem:[#allocation11 + $0x68] sm:$0xff]
        %v2088 = vld [vmem:[#allocation11 + $0x70] sm:$0xff]
        %v2089 = vld [vmem:[#allocation11 + $0x78] sm:$0xff]
        %v2090 = vld [vmem:[#allocation11 + $0x80] sm:$0xff]
        %v2091 = vld [vmem:[#allocation11 + $0x88] sm:$0xff]
        %v2092 = vld [vmem:[#allocation11 + $0x90] sm:$0xff]
        %v2093 = vld [vmem:[#allocation11 + $0x98] sm:$0xff]
        %v2094 = vld [vmem:[#allocation11 + $0xa0] sm:$0xff]
        %v2095 = vld [vmem:[#allocation11 + $0xa8] sm:$0xff]
        %v2096 = vld [vmem:[#allocation11 + $0xb0] sm:$0xff]
        %v2097 = vld [vmem:[#allocation11 + $0xb8] sm:$0xff]
        %v2098 = vld [vmem:[#allocation11 + $0xc0] sm:$0xff]
        %v2099 = vld [vmem:[#allocation11 + $0xc8] sm:$0xff]
        %v2100 = vld [vmem:[#allocation11 + $0xd0] sm:$0xff]
        %v2101 = vld [vmem:[#allocation11 + $0xd8] sm:$0xff]
        %v2102 = vld [vmem:[#allocation11 + $0xe0] sm:$0xff]
        %v2103 = vld [vmem:[#allocation11 + $0xe8] sm:$0xff]
        %v2104 = vld [vmem:[#allocation11 + $0xf0] sm:$0xff]
        %v2105 = vld [vmem:[#allocation11 + $0xf8] sm:$0xff]
        %v2106 = vld [vmem:[#allocation11 + $0x100] sm:$0xff]
        %v2107 = vld [vmem:[#allocation11 + $0x108] sm:$0xff]
        %v2108 = vld [vmem:[#allocation11 + $0x110] sm:$0xff]
        %v2109 = vld [vmem:[#allocation11 + $0x118] sm:$0xff]
        %v2110 = vld [vmem:[#allocation11 + $0x120] sm:$0xff]
        %v2111 = vld [vmem:[#allocation11 + $0x128] sm:$0xff]
        %v2112 = vld [vmem:[#allocation11 + $0x130] sm:$0xff]
        %v2113 = vld [vmem:[#allocation11 + $0x138] sm:$0xff]
        %v2114 = vld [vmem:[#allocation11 + $0x140] sm:$0xff]
        %v2115 = vld [vmem:[#allocation11 + $0x148] sm:$0xff]
        %v2116 = vld [vmem:[#allocation11 + $0x150] sm:$0xff]
        %v2117 = vld [vmem:[#allocation11 + $0x158] sm:$0xff]
        %v2118 = vld [vmem:[#allocation11 + $0x160] sm:$0xff]
        %v2119 = vld [vmem:[#allocation11 + $0x168] sm:$0xff]
        %v2120 = vld [vmem:[#allocation11 + $0x170] sm:$0xff]
        %v2121 = vld [vmem:[#allocation11 + $0x178] sm:$0xff]
        %v2122 = vld [vmem:[#allocation11 + $0x180] sm:$0xff]
        %v2123 = vld [vmem:[#allocation11 + $0x188] sm:$0xff]
        %v2124 = vld [vmem:[#allocation11 + $0x190] sm:$0xff]
        %v2125 = vld [vmem:[#allocation11 + $0x198] sm:$0xff]
        %v2126 = vld [vmem:[#allocation11 + $0x1a0] sm:$0xff]
        %v2127 = vld [vmem:[#allocation11 + $0x1a8] sm:$0xff]
        %v2128 = vld [vmem:[#allocation11 + $0x1b0] sm:$0xff]
        %v2129 = vld [vmem:[#allocation11 + $0x1b8] sm:$0xff]
        %v2130 = vld [vmem:[#allocation11 + $0x1c0] sm:$0xff]
        %v2131 = vld [vmem:[#allocation11 + $0x1c8] sm:$0xff]
        %v2132 = vld [vmem:[#allocation11 + $0x1d0] sm:$0xff]
        %v2133 = vld [vmem:[#allocation11 + $0x1d8] sm:$0xff]
        %v2134 = vld [vmem:[#allocation11 + $0x1e0] sm:$0xff]
        %v2135 = vld [vmem:[#allocation11 + $0x1e8] sm:$0xff]
        %v2136 = vld [vmem:[#allocation11 + $0x1f0] sm:$0xff]
        %v2137 = vld [vmem:[#allocation11 + $0x1f8] sm:$0xff]
        %v2138 = vld [vmem:[#allocation13] sm:$0x1]
        %v2140 = vlaneseq
        %v2141 = vshrl.u32 %v2140, 7
        %v2142 = vsub.s32 0, %v2141
        %v2143 = vrot.slane %v2138, %v2142
        %2145 = vmatprep.subr.mxu0 0.0
        %2146 = vmatpush1.msra.mxu0 %v2089
        %2147 = vmatprep.subr.mxu0 0.0
        %2148 = vmatpush1.msra.mxu0 %v2088
        %2149 = vmatprep.subr.mxu0 0.0
        %2150 = vmatpush1.msra.mxu0 %v2087
        %2151 = vmatprep.subr.mxu0 0.0
        %2152 = vmatpush1.msra.mxu0 %v2086
        %2153 = vmatprep.subr.mxu0 0.0
        %2154 = vmatpush1.msra.mxu0 %v2085
        %2155 = vmatprep.subr.mxu0 0.0
        %2156 = vmatpush1.msra.mxu0 %v2084
        %2157 = vmatprep.subr.mxu0 0.0
        %2158 = vmatpush1.msra.mxu0 %v2083
        %2159 = vmatprep.subr.mxu0 0.0
        %2160 = vmatpush1.msra.mxu0 %v2082
        %2161 = vmatprep.subr.mxu0 0.0
        %2162 = vmatpush1.msra.mxu0 %v2081
        %2163 = vmatprep.subr.mxu0 0.0
        %2164 = vmatpush1.msra.mxu0 %v2080
        %2165 = vmatprep.subr.mxu0 0.0
        %2166 = vmatpush1.msra.mxu0 %v2079
        %2167 = vmatprep.subr.mxu0 0.0
        %2168 = vmatpush1.msra.mxu0 %v2078
        %2169 = vmatprep.subr.mxu0 0.0
        %2170 = vmatpush1.msra.mxu0 %v2077
        %2171 = vmatprep.subr.mxu0 0.0
        %2172 = vmatpush1.msra.mxu0 %v2076
        %2173 = vmatprep.subr.mxu0 0.0
        %2174 = vmatpush1.msra.mxu0 %v2075
        %2175 = vmatprep.subr.mxu0 0.0
        %2176 = vmatpush1.msra.mxu0 %v2074
        %2177 = vmatprep.subr.mxu0 0.0
        %2178 = vmatpush2.msra.mxu0 %v2105
        %2179 = vmatprep.subr.mxu0 0.0
        %2180 = vmatpush2.msra.mxu0 %v2104
        %2181 = vmatprep.subr.mxu0 0.0
        %2182 = vmatpush2.msra.mxu0 %v2103
        %2183 = vmatprep.subr.mxu0 0.0
        %2184 = vmatpush2.msra.mxu0 %v2102
        %2185 = vmatprep.subr.mxu0 0.0
        %2186 = vmatpush2.msra.mxu0 %v2101
        %2187 = vmatprep.subr.mxu0 0.0
        %2188 = vmatpush2.msra.mxu0 %v2100
        %2189 = vmatprep.subr.mxu0 0.0
        %2190 = vmatpush2.msra.mxu0 %v2099
        %2191 = vmatprep.subr.mxu0 0.0
        %2192 = vmatpush2.msra.mxu0 %v2098
        %2193 = vmatprep.subr.mxu0 0.0
        %2194 = vmatpush2.msra.mxu0 %v2097
        %2195 = vmatprep.subr.mxu0 0.0
        %2196 = vmatpush2.msra.mxu0 %v2096
        %2197 = vmatprep.subr.mxu0 0.0
        %2198 = vmatpush2.msra.mxu0 %v2095
        %2199 = vmatprep.subr.mxu0 0.0
        %2200 = vmatpush2.msra.mxu0 %v2094
        %2201 = vmatprep.subr.mxu0 0.0
        %2202 = vmatpush2.msra.mxu0 %v2093
        %2203 = vmatprep.subr.mxu0 0.0
        %2204 = vmatpush2.msra.mxu0 %v2092
        %2205 = vmatprep.subr.mxu0 0.0
        %2206 = vmatpush2.msra.mxu0 %v2091
        %2207 = vmatprep.subr.mxu0 0.0
        %2208 = vmatpush2.msra.mxu0 %v2090
        %2209 = vmatprep.mubr.f32.mxu0 %v2071
        %2210 = vmatmul.mubr.f32.gmra.mxu0 %v2070
        %v2211 = vpop.f32.mrf.mxu0
        %v2212 = vadd.f32 %v2143, %v2211
        %v2213 = vpop.f32.mrf.mxu0
        %2214 = vdwg.mxu0
        %2215 = vmatprep.subr.mxu0 0.0
        %2216 = vmatpush1.msra.mxu0 %v2121
        %2217 = vmatprep.subr.mxu0 0.0
        %2218 = vmatpush1.msra.mxu0 %v2120
        %2219 = vmatprep.subr.mxu0 0.0
        %2220 = vmatpush1.msra.mxu0 %v2119
        %2221 = vmatprep.subr.mxu0 0.0
        %2222 = vmatpush1.msra.mxu0 %v2118
        %2223 = vmatprep.subr.mxu0 0.0
        %2224 = vmatpush1.msra.mxu0 %v2117
        %2225 = vmatprep.subr.mxu0 0.0
        %2226 = vmatpush1.msra.mxu0 %v2116
        %2227 = vmatprep.subr.mxu0 0.0
        %2228 = vmatpush1.msra.mxu0 %v2115
        %2229 = vmatprep.subr.mxu0 0.0
        %2230 = vmatpush1.msra.mxu0 %v2114
        %2231 = vmatprep.subr.mxu0 0.0
        %2232 = vmatpush1.msra.mxu0 %v2113
        %2233 = vmatprep.subr.mxu0 0.0
        %2234 = vmatpush1.msra.mxu0 %v2112
        %2235 = vmatprep.subr.mxu0 0.0
        %2236 = vmatpush1.msra.mxu0 %v2111
        %2237 = vmatprep.subr.mxu0 0.0
        %2238 = vmatpush1.msra.mxu0 %v2110
        %2239 = vmatprep.subr.mxu0 0.0
        %2240 = vmatpush1.msra.mxu0 %v2109
        %2241 = vmatprep.subr.mxu0 0.0
        %2242 = vmatpush1.msra.mxu0 %v2108
        %2243 = vmatprep.subr.mxu0 0.0
        %2244 = vmatpush1.msra.mxu0 %v2107
        %2245 = vmatprep.subr.mxu0 0.0
        %2246 = vmatpush1.msra.mxu0 %v2106
        %2247 = vmatprep.subr.mxu0 0.0
        %2248 = vmatpush2.msra.mxu0 %v2137
        %2249 = vmatprep.subr.mxu0 0.0
        %2250 = vmatpush2.msra.mxu0 %v2136
        %2251 = vmatprep.subr.mxu0 0.0
        %2252 = vmatpush2.msra.mxu0 %v2135
        %2253 = vmatprep.subr.mxu0 0.0
        %2254 = vmatpush2.msra.mxu0 %v2134
        %2255 = vmatprep.subr.mxu0 0.0
        %2256 = vmatpush2.msra.mxu0 %v2133
        %2257 = vmatprep.subr.mxu0 0.0
        %2258 = vmatpush2.msra.mxu0 %v2132
        %2259 = vmatprep.subr.mxu0 0.0
        %2260 = vmatpush2.msra.mxu0 %v2131
        %2261 = vmatprep.subr.mxu0 0.0
        %2262 = vmatpush2.msra.mxu0 %v2130
        %2263 = vmatprep.subr.mxu0 0.0
        %2264 = vmatpush2.msra.mxu0 %v2129
        %2265 = vmatprep.subr.mxu0 0.0
        %2266 = vmatpush2.msra.mxu0 %v2128
        %2267 = vmatprep.subr.mxu0 0.0
        %2268 = vmatpush2.msra.mxu0 %v2127
        %2269 = vmatprep.subr.mxu0 0.0
        %2270 = vmatpush2.msra.mxu0 %v2126
        %2271 = vmatprep.subr.mxu0 0.0
        %2272 = vmatpush2.msra.mxu0 %v2125
        %2273 = vmatprep.subr.mxu0 0.0
        %2274 = vmatpush2.msra.mxu0 %v2124
        %2275 = vmatprep.subr.mxu0 0.0
        %2276 = vmatpush2.msra.mxu0 %v2123
        %2277 = vmatprep.subr.mxu0 0.0
        %2278 = vmatpush2.msra.mxu0 %v2122
        %2279 = vmatprep.mubr.f32.mxu0 %v2073
        %2280 = vmatmul.mubr.f32.gmra.mxu0 %v2072
        %v2281 = vpop.f32.mrf.mxu0
        %v2282 = vadd.f32 %v2212, %v2281
        %v2283 = vpop.f32.mrf.mxu0
        %2284 = vdwg.mxu0
        %v2285 = vxor.u32 %v2282, 2147483648
        %v2286 = vmul.f32 %v2285, 1.442695
        %v2287 = vpow.pop %v2286
        %v2288 = vadd.f32 %v2287, 1.0
        %v2289 = vrcp.pop %v2288
        %v2290 = vmul.f32 1.0, %v2289
        %2291 = vst [vmem:[%s375] sm:$0xff] %v2290
        %s2292 = sand.u32 %s187, 1
        %s2293 = scalar_lea.sflag [#allocation4], %s2292
        %s2294 = sand.u32 %s187, 1
        %s2295 = smul.addr %s2294, 8
        %s2296 = scalar_lea.vmem [#allocation14], %s2295
        // Predicated region
        $region77: #{tpu_custom_call.1} parent=47 // pred_check
          %p2297 = pneg %p197
        $region78: #{tpu_custom_call.1} parent=47 // pred_check_branch
          %2299 = sbr.rel (%p2297) target = $region80
        $region79: #{tpu_custom_call.1} parent=47 // pred_region
          %s2301 = ssub.s32 128, 128
          %2302 = vsyncadd %s2293, %s2301
          %s2303 = smul.addr %s27, 128
          %s2304 = scalar_lea.hbm %s7, %s2303
          %s2306 = sshll.u32 %s2296, 4
          %s2307 = int_to_ptr.vmem [resolvable:$true] %s2306
          %2309 = dma.vmem_to_hbm [thread:$0]  %s2307, 128, %s2304, %s2293
        $region80: #{tpu_custom_call.1} parent=47 // pred_fallthru
          _
      $region48: #{tpu_custom_call.1} parent=5 // pred_fallthru
        _
      %p2310 = scmp.le.s32.totalorder 2, %s22
      // Predicated region
      $region81: #{tpu_custom_call.1} parent=5 // pred_check
        %p2311 = pneg %p2310
      $region82: #{tpu_custom_call.1} parent=5 // pred_check_branch
        %2313 = sbr.rel (%p2311) target = $region84
      $region83: #{tpu_custom_call.1} parent=5 // pred_region
        %s2314 = ssub.s32 %s22, 2
        // Predicated region
        $region85: #{tpu_custom_call.1} parent=83 // pred_check
          %p2315 = pneg %p203
        $region86: #{tpu_custom_call.1} parent=83 // pred_check_branch
          %2317 = sbr.rel (%p2315) target = $region88
        $region87: #{tpu_custom_call.1} parent=83 // pred_region
          %s2318 = sand.u32 %s188, 1
          %s2319 = scalar_lea.sflag [#allocation4], %s2318
          %s2320 = sand.u32 %s188, 1
          %s2321 = smul.addr %s2320, 8
          %s2322 = scalar_lea.vmem [#allocation14], %s2321
          %2323 = dma.done %s2319, 128
        $region88: #{tpu_custom_call.1} parent=83 // pred_fallthru
          _
      $region84: #{tpu_custom_call.1} parent=5 // pred_fallthru
        _
    $region6: #{tpu_custom_call.1} parent=1 // loop_footer
      %s26 = sadd.s32 1, %s22
    $region7: #{tpu_custom_call.1} parent=1 // loop_footer_branch
      %21 = sbr.rel target = $region3
    $region8: #{tpu_custom_call.1} parent=1 // loop_exit
      _
    %2324 = vsyncpa [#allocation3], 1
    %s2325 = scalar_lea.sflag [#allocation3], 1
    %2326 = vsyncpa %s2325, 1
    %2327 = vsyncpa [#allocation6], 1
    %2328 = vsyncpa [#allocation9], 1
    %2329 = vsyncpa [#allocation12], 1
    %2330 = vsyncpa [#allocation4], 1
    %s2331 = scalar_lea.sflag [#allocation4], 1
    %2332 = vsyncpa %s2331, 1

</llo_original>
